<compile_context>
chip_gen: v5e
topology: v5e:2x2
jax: 0.10.0
libtpu: 0.0.40
codegen_flags: <defaults>
</compile_context>

<pallas_src>
import numpy as np
import jax
import jax.numpy as jnp
from jax.experimental import pallas as pl
from jax.experimental.pallas import tpu as pltpu


# ------------------------------ fused kernel --------------------------------

def _resblock_down_kernel(x_ref, w1_ref, b1_ref, w2_ref, b2_ref, ws_ref,
                          o_ref, xp1_ref, xp2_ref):
    # x_ref : (1, H, WP, 2*Cin)   column-paired input image (f32), WP = W//2
    # w1_ref: (18*Cin, 2*Cin)     conv1 weight folded for the pair layout (bf16)
    # b1_ref: (1, 2*Cin)          conv1 bias duplicated per pixel parity (f32)
    # w2_ref: (9*Cin, Cout)       conv2 weight, im2col layout (bf16)
    # b2_ref: (1, Cout)           conv2 bias (f32)
    # ws_ref: (Cin, Cout)         1x1 skip weight (bf16)
    # o_ref : (1, Hh*Wh, Cout)    final output rows ordered (hh, w)  (f32)
    # xp1_ref: (H+2, WP+2, 2*Cin) zero-padded halo scratch for conv1 (f32)
    # xp2_ref: (Hh+2, Wh+2, Cin)  zero-padded halo scratch for conv2 (f32)
    H, WP, C2 = x_ref.shape[1], x_ref.shape[2], x_ref.shape[3]
    Cin = C2 // 2
    Hh, Wh = H // 2, WP            # half-res size; Wh == W//2 == WP
    Cout = o_ref.shape[2]

    x = x_ref[0]                                        # (H, WP, 2*Cin) f32

    # ---- conv1 (3x3, Cin->Cin) + leaky_relu, single im2col matmul ----
    # halo handled in-kernel: zero scratch, copy interior (no wrapper jnp.pad)
    xp1_ref[...] = jnp.zeros_like(xp1_ref)
    xp1_ref[1:H + 1, 1:WP + 1, :] = x
    xp1 = xp1_ref[...]
    taps1 = [xp1[dy:dy + H, dk:dk + WP, :]              # (H, WP, 2*Cin) each
             for dy in range(3) for dk in range(3)]
    p1 = jnp.concatenate(taps1, axis=-1)                # (H, WP, 9*2*Cin)
    p1 = p1.reshape(H * WP, 9 * C2).astype(jnp.bfloat16)
    y1 = jnp.dot(p1, w1_ref[...], preferred_element_type=jnp.float32)
    y1 = y1 + b1_ref[...]                               # (H*WP, 2*Cin) f32
    y1 = jnp.where(y1 >= 0.0, y1, 0.2 * y1)             # leaky_relu(0.2)

    # ---- 2x2 average pool on the VPU (no pooling matrix) ----
    # horizontal: the two pixels of a column pair live in the two lane halves
    h1 = y1[:, :Cin] + y1[:, Cin:]                      # (H*WP, Cin)
    # vertical: adjacent rows h = 2*hh, 2*hh + 1
    h1 = h1.reshape(Hh, 2, WP, Cin)
    h1 = 0.25 * (h1[:, 0] + h1[:, 1])                   # (Hh, Wh, Cin)

    # same 2x2 pool on the raw input for the skip path
    xd = x[:, :, :Cin] + x[:, :, Cin:]                  # (H, WP, Cin)
    xd = xd.reshape(Hh, 2, WP, Cin)
    xd = 0.25 * (xd[:, 0] + xd[:, 1])                   # (Hh, Wh, Cin)

    # ---- conv2 (3x3, Cin->Cout) + leaky_relu on the half-res activation ----
    xp2_ref[...] = jnp.zeros_like(xp2_ref)
    xp2_ref[1:Hh + 1, 1:Wh + 1, :] = h1
    xp2 = xp2_ref[...]
    taps2 = [xp2[dy:dy + Hh, dx:dx + Wh, :]             # (Hh, Wh, Cin) each
             for dy in range(3) for dx in range(3)]
    p2 = jnp.concatenate(taps2, axis=-1)                # (Hh, Wh, 9*Cin)
    p2 = p2.reshape(Hh * Wh, 9 * Cin).astype(jnp.bfloat16)
    y2 = jnp.dot(p2, w2_ref[...], preferred_element_type=jnp.float32)
    y2 = y2 + b2_ref[...]                               # (Hh*Wh, Cout)
    y2 = jnp.where(y2 >= 0.0, y2, 0.2 * y2)

    # ---- 1x1 skip conv (no bias) + residual add ----
    xdf = xd.reshape(Hh * Wh, Cin).astype(jnp.bfloat16)
    skip = jnp.dot(xdf, ws_ref[...], preferred_element_type=jnp.float32)
    o_ref[0] = y2 + skip                                # (Hh*Wh, Cout)


# --------------------------- weight preparation ------------------------------

def _pair_conv3x3_weight(w_oihw, dtype=jnp.bfloat16):
    """Fold a 3x3 OIHW conv weight for the column-pair im2col formulation.

    Returns (3*3*2*Cin, 2*Cout): row = ((dy*3 + dk)*2 + q)*Cin + ci, where dy is
    the tap row, dk the tapped column-pair offset and q the parity inside that
    pair; col = p*Cout + co where p is the parity of the produced output pixel.
    """
    Cout, Cin = w_oihw.shape[0], w_oihw.shape[1]
    w = jnp.transpose(w_oihw, (2, 3, 1, 0))             # (dy, dx, ci, co)
    z = jnp.zeros((3, 3, 2, Cin, 2, Cout), w.dtype)
    # output parity p=0 (column 2*wh):   dx 0,1,2 -> (dk, q) = (0,1),(1,0),(1,1)
    z = z.at[:, 0, 1, :, 0, :].set(w[:, 0])
    z = z.at[:, 1, 0, :, 0, :].set(w[:, 1])
    z = z.at[:, 1, 1, :, 0, :].set(w[:, 2])
    # output parity p=1 (column 2*wh+1): dx 0,1,2 -> (dk, q) = (1,0),(1,1),(2,0)
    z = z.at[:, 1, 0, :, 1, :].set(w[:, 0])
    z = z.at[:, 1, 1, :, 1, :].set(w[:, 1])
    z = z.at[:, 2, 0, :, 1, :].set(w[:, 2])
    return z.reshape(3 * 3 * 2 * Cin, 2 * Cout).astype(dtype)


# ------------------------------ public wrapper --------------------------------

def resblock_forward(x_nchw, w1_oihw, b1, w2_oihw, b2, ws_oihw):
    """ResBlock forward, mode='down'.  Input/output in NCHW (PyTorch layout)."""
    N, Cin, H, W = x_nchw.shape
    Cout = w2_oihw.shape[0]
    # bilinear(0.5, align_corners=False) == 2x2 avg pool only for even sizes;
    # the column-pair layout / sublane-aligned reshapes need W % 16 == 0 here.
    assert H % 2 == 0 and W % 16 == 0, (H, W)
    Hh, Wh = H // 2, W // 2
    WP = W // 2                                          # paired width

    # Layout plumbing at the PyTorch boundary: one transpose + a free reshape.
    x = jnp.transpose(x_nchw, (0, 2, 3, 1)).reshape(N, H, WP, 2 * Cin)

    w1p = _pair_conv3x3_weight(w1_oihw)                              # bf16
    b1p = jnp.concatenate([b1, b1]).reshape(1, 2 * Cin).astype(jnp.float32)
    w2r = jnp.transpose(w2_oihw, (2, 3, 1, 0)).reshape(9 * Cin, Cout)
    w2r = w2r.astype(jnp.bfloat16)
    b2r = b2.reshape(1, Cout).astype(jnp.float32)
    wsr = jnp.transpose(ws_oihw[:, :, 0, 0], (1, 0)).astype(jnp.bfloat16)

    out = pl.pallas_call(
        _resblock_down_kernel,
        out_shape=jax.ShapeDtypeStruct((N, Hh * Wh, Cout), jnp.float32),
        grid=(N,),
        in_specs=[
            pl.BlockSpec((1, H, WP, 2 * Cin), lambda n: (n, 0, 0, 0)),
            pl.BlockSpec((9 * 2 * Cin, 2 * Cin), lambda n: (0, 0)),
            pl.BlockSpec((1, 2 * Cin), lambda n: (0, 0)),
            pl.BlockSpec((9 * Cin, Cout), lambda n: (0, 0)),
            pl.BlockSpec((1, Cout), lambda n: (0, 0)),
            pl.BlockSpec((Cin, Cout), lambda n: (0, 0)),
        ],
        out_specs=pl.BlockSpec((1, Hh * Wh, Cout), lambda n: (n, 0, 0)),
        scratch_shapes=[
            pltpu.VMEM((H + 2, WP + 2, 2 * Cin), jnp.float32),
            pltpu.VMEM((Hh + 2, Wh + 2, Cin), jnp.float32),
        ],
        compiler_params=pltpu.CompilerParams(
            dimension_semantics=("parallel",)),
    )(x, w1p, b1p, w2r, b2r, wsr)

    # rows of `out` are (hh, w); flat order equals NHWC, so the reshape is free.
    out = out.reshape(N, Hh, Wh, Cout)
    return jnp.transpose(out, (0, 3, 1, 2))              # NHWC -> NCHW


# ----------------------------- pure-JAX reference -----------------------------

def _ref_forward(x, w1, b1, w2, b2, ws):
    def conv(x, w, b=None, pad=1):
        y = jax.lax.conv_general_dilated(
            x, w, (1, 1), [(pad, pad), (pad, pad)],
            dimension_numbers=('NCHW', 'OIHW', 'NCHW'),
            precision=jax.lax.Precision.HIGHEST)
        if b is not None:
            y = y + b[None, :, None, None]
        return y

    def lrelu(v):
        return jnp.where(v >= 0, v, 0.2 * v)

    def down(v):
        N, C, H, W = v.shape
        return v.reshape(N, C, H // 2, 2, W // 2, 2).mean(axis=(3, 5))

    out = lrelu(conv(x, w1, b1))
    out = down(out)
    out = lrelu(conv(out, w2, b2))
    skip = conv(down(x), ws, None, pad=0)
    return out + skip


# ----------------------------------- main --------------------------------------

if __name__ == "__main__":
    N, Cin, Cout, H, W = 2, 4, 8, 16, 16
    key = jax.random.PRNGKey(0)
    k = jax.random.split(key, 6)

    x = jax.random.normal(k[0], (N, Cin, H, W), jnp.float32)
    # Deterministic synthetic parameters (shapes per nn.Conv2d in __init__).
    w1 = jax.random.normal(k[1], (Cin, Cin, 3, 3), jnp.float32) * 0.1
    b1 = jax.random.normal(k[2], (Cin,), jnp.float32) * 0.1
    w2 = jax.random.normal(k[3], (Cout, Cin, 3, 3), jnp.float32) * 0.1
    b2 = jax.random.normal(k[4], (Cout,), jnp.float32) * 0.1
    ws = jax.random.normal(k[5], (Cout, Cin, 1, 1), jnp.float32) * 0.1

    out = resblock_forward(x, w1, b1, w2, b2, ws)
    out = jax.block_until_ready(out)
    assert out.shape == (N, Cout, H // 2, W // 2), out.shape

    ref = _ref_forward(x, w1, b1, w2, b2, ws)
    # bf16 MXU matmuls with f32 accumulation -> slightly looser tolerance.
    np.testing.assert_allclose(np.asarray(out), np.asarray(ref),
                               atol=2e-2, rtol=2e-2)
    print("KERNEL_OK")
</pallas_src>

<mosaic_0001>
module attributes {stable_mosaic.version = 11 : i64} {
  func.func @_resblock_down_kernel(%arg0: i32, %arg1: memref<1x16x8x8xf32, #tpu.memory_space<vmem>>, %arg2: memref<72x8xbf16, #tpu.memory_space<vmem>>, %arg3: memref<1x8xf32, #tpu.memory_space<vmem>>, %arg4: memref<36x8xbf16, #tpu.memory_space<vmem>>, %arg5: memref<1x8xf32, #tpu.memory_space<vmem>>, %arg6: memref<4x8xbf16, #tpu.memory_space<vmem>>, %arg7: memref<1x64x8xf32, #tpu.memory_space<vmem>>, %arg8: memref<18x10x8xf32, #tpu.memory_space<vmem>>, %arg9: memref<10x10x4xf32, #tpu.memory_space<vmem>>) attributes {dimension_semantics = [#tpu.dimension_semantics<parallel>], iteration_bounds = array<i64: 2>, scalar_prefetch = 0 : i64, scratch_operands = 2 : i64, tpu.core_type = #tpu.core_type<tc>, window_params = [{transform_indices = @transform_0, window_bounds = array<i64: 1, 16, 8, 8>}, {pipeline_mode = #tpu.pipeline_mode<synchronous>, transform_indices = @transform_1, window_bounds = array<i64: 72, 8>}, {pipeline_mode = #tpu.pipeline_mode<synchronous>, transform_indices = @transform_2, window_bounds = array<i64: 1, 8>}, {pipeline_mode = #tpu.pipeline_mode<synchronous>, transform_indices = @transform_3, window_bounds = array<i64: 36, 8>}, {pipeline_mode = #tpu.pipeline_mode<synchronous>, transform_indices = @transform_4, window_bounds = array<i64: 1, 8>}, {pipeline_mode = #tpu.pipeline_mode<synchronous>, transform_indices = @transform_5, window_bounds = array<i64: 4, 8>}, {transform_indices = @transform_6, window_bounds = array<i64: 1, 64, 8>}]} {
    %c0 = arith.constant 0 : index
    %c0_0 = arith.constant 0 : index
    %c0_1 = arith.constant 0 : index
    %c0_2 = arith.constant 0 : index
    %0 = vector.load %arg1[%c0, %c0_0, %c0_1, %c0_2] : memref<1x16x8x8xf32, #tpu.memory_space<vmem>>, vector<1x16x8x8xf32>
    %1 = vector.shape_cast %0 : vector<1x16x8x8xf32> to vector<16x8x8xf32>
    %cst = arith.constant 0.000000e+00 : f32
    %2 = vector.broadcast %cst : f32 to vector<18x10x8xf32>
    %c0_3 = arith.constant 0 : index
    %c0_4 = arith.constant 0 : index
    %c0_5 = arith.constant 0 : index
    %3 = vector.load %arg8[%c0_3, %c0_4, %c0_5] : memref<18x10x8xf32, #tpu.memory_space<vmem>>, vector<18x10x8xf32>
    tpu.vector_store %arg8[%c0_3, %c0_4, %c0_5], %2 {strides = array<i32>} : memref<18x10x8xf32, #tpu.memory_space<vmem>>, vector<18x10x8xf32>,
    %c1 = arith.constant 1 : index
    %c1_6 = arith.constant 1 : index
    %c0_7 = arith.constant 0 : index
    %4 = vector.load %arg8[%c1, %c1_6, %c0_7] : memref<18x10x8xf32, #tpu.memory_space<vmem>>, vector<16x8x8xf32>
    tpu.vector_store %arg8[%c1, %c1_6, %c0_7], %1 {strides = array<i32>} : memref<18x10x8xf32, #tpu.memory_space<vmem>>, vector<16x8x8xf32>,
    %c0_8 = arith.constant 0 : index
    %c0_9 = arith.constant 0 : index
    %c0_10 = arith.constant 0 : index
    %5 = vector.load %arg8[%c0_8, %c0_9, %c0_10] : memref<18x10x8xf32, #tpu.memory_space<vmem>>, vector<18x10x8xf32>
    %6 = vector.extract_strided_slice %5 {offsets = [0, 0, 0], sizes = [16, 8, 8], strides = [1, 1, 1]} : vector<18x10x8xf32> to vector<16x8x8xf32>
    %7 = vector.extract_strided_slice %5 {offsets = [0, 1, 0], sizes = [16, 8, 8], strides = [1, 1, 1]} : vector<18x10x8xf32> to vector<16x8x8xf32>
    %8 = vector.extract_strided_slice %5 {offsets = [0, 2, 0], sizes = [16, 8, 8], strides = [1, 1, 1]} : vector<18x10x8xf32> to vector<16x8x8xf32>
    %9 = vector.extract_strided_slice %5 {offsets = [1, 0, 0], sizes = [16, 8, 8], strides = [1, 1, 1]} : vector<18x10x8xf32> to vector<16x8x8xf32>
    %10 = vector.extract_strided_slice %5 {offsets = [1, 1, 0], sizes = [16, 8, 8], strides = [1, 1, 1]} : vector<18x10x8xf32> to vector<16x8x8xf32>
    %11 = vector.extract_strided_slice %5 {offsets = [1, 2, 0], sizes = [16, 8, 8], strides = [1, 1, 1]} : vector<18x10x8xf32> to vector<16x8x8xf32>
    %12 = vector.extract_strided_slice %5 {offsets = [2, 0, 0], sizes = [16, 8, 8], strides = [1, 1, 1]} : vector<18x10x8xf32> to vector<16x8x8xf32>
    %13 = vector.extract_strided_slice %5 {offsets = [2, 1, 0], sizes = [16, 8, 8], strides = [1, 1, 1]} : vector<18x10x8xf32> to vector<16x8x8xf32>
    %14 = vector.extract_strided_slice %5 {offsets = [2, 2, 0], sizes = [16, 8, 8], strides = [1, 1, 1]} : vector<18x10x8xf32> to vector<16x8x8xf32>
    %15 = tpu.concatenate %6, %7, %8, %9, %10, %11, %12, %13, %14 in 2 : vector<16x8x8xf32>, vector<16x8x8xf32>, vector<16x8x8xf32>, vector<16x8x8xf32>, vector<16x8x8xf32>, vector<16x8x8xf32>, vector<16x8x8xf32>, vector<16x8x8xf32>, vector<16x8x8xf32> -> vector<16x8x72xf32>
    %16 = vector.shape_cast %15 : vector<16x8x72xf32> to vector<128x72xf32>
    %17 = arith.truncf %16 : vector<128x72xf32> to vector<128x72xbf16>
    %c0_11 = arith.constant 0 : index
    %c0_12 = arith.constant 0 : index
    %18 = vector.load %arg2[%c0_11, %c0_12] : memref<72x8xbf16, #tpu.memory_space<vmem>>, vector<72x8xbf16>
    %cst_13 = arith.constant dense<0.000000e+00> : vector<128x8xf32>
    %19 = tpu.matmul %17, %18, %cst_13 {dimension_numbers = #tpu.dot_dimension_numbers<[1], [0], [0], [1], [0, 0, 1, 1], [], []>} : vector<128x72xbf16>, vector<72x8xbf16>, vector<128x8xf32> -> vector<128x8xf32>
    %c0_14 = arith.constant 0 : index
    %c0_15 = arith.constant 0 : index
    %20 = vector.load %arg3[%c0_14, %c0_15] : memref<1x8xf32, #tpu.memory_space<vmem>>, vector<1x8xf32>
    %21 = vector.broadcast %20 : vector<1x8xf32> to vector<128x8xf32>
    %22 = arith.addf %19, %21 : vector<128x8xf32>
    %cst_16 = arith.constant 0.000000e+00 : f32
    %23 = vector.broadcast %cst_16 : f32 to vector<128x8xf32>
    %24 = arith.cmpf oge, %22, %23 : vector<128x8xf32>
    %cst_17 = arith.constant 2.000000e-01 : f32
    %25 = vector.broadcast %cst_17 : f32 to vector<128x8xf32>
    %26 = arith.mulf %25, %22 : vector<128x8xf32>
    %27 = arith.select %24, %22, %26 : vector<128x8xi1>, vector<128x8xf32>
    %28 = vector.extract_strided_slice %27 {offsets = [0, 0], sizes = [128, 4], strides = [1, 1]} : vector<128x8xf32> to vector<128x4xf32>
    %29 = vector.extract_strided_slice %27 {offsets = [0, 4], sizes = [128, 4], strides = [1, 1]} : vector<128x8xf32> to vector<128x4xf32>
    %30 = arith.addf %28, %29 : vector<128x4xf32>
    %31 = vector.shape_cast %30 : vector<128x4xf32> to vector<8x2x8x4xf32>
    %32 = vector.extract_strided_slice %31 {offsets = [0, 0, 0, 0], sizes = [8, 1, 8, 4], strides = [1, 1, 1, 1]} : vector<8x2x8x4xf32> to vector<8x1x8x4xf32>
    %33 = vector.shape_cast %32 : vector<8x1x8x4xf32> to vector<8x8x4xf32>
    %34 = vector.extract_strided_slice %31 {offsets = [0, 1, 0, 0], sizes = [8, 1, 8, 4], strides = [1, 1, 1, 1]} : vector<8x2x8x4xf32> to vector<8x1x8x4xf32>
    %35 = vector.shape_cast %34 : vector<8x1x8x4xf32> to vector<8x8x4xf32>
    %36 = arith.addf %33, %35 : vector<8x8x4xf32>
    %cst_18 = arith.constant 2.500000e-01 : f32
    %37 = vector.broadcast %cst_18 : f32 to vector<8x8x4xf32>
    %38 = arith.mulf %37, %36 : vector<8x8x4xf32>
    %39 = vector.extract_strided_slice %1 {offsets = [0, 0, 0], sizes = [16, 8, 4], strides = [1, 1, 1]} : vector<16x8x8xf32> to vector<16x8x4xf32>
    %40 = vector.extract_strided_slice %1 {offsets = [0, 0, 4], sizes = [16, 8, 4], strides = [1, 1, 1]} : vector<16x8x8xf32> to vector<16x8x4xf32>
    %41 = arith.addf %39, %40 : vector<16x8x4xf32>
    %42 = vector.shape_cast %41 : vector<16x8x4xf32> to vector<8x2x8x4xf32>
    %43 = vector.extract_strided_slice %42 {offsets = [0, 0, 0, 0], sizes = [8, 1, 8, 4], strides = [1, 1, 1, 1]} : vector<8x2x8x4xf32> to vector<8x1x8x4xf32>
    %44 = vector.shape_cast %43 : vector<8x1x8x4xf32> to vector<8x8x4xf32>
    %45 = vector.extract_strided_slice %42 {offsets = [0, 1, 0, 0], sizes = [8, 1, 8, 4], strides = [1, 1, 1, 1]} : vector<8x2x8x4xf32> to vector<8x1x8x4xf32>
    %46 = vector.shape_cast %45 : vector<8x1x8x4xf32> to vector<8x8x4xf32>
    %47 = arith.addf %44, %46 : vector<8x8x4xf32>
    %cst_19 = arith.constant 2.500000e-01 : f32
    %48 = vector.broadcast %cst_19 : f32 to vector<8x8x4xf32>
    %49 = arith.mulf %48, %47 : vector<8x8x4xf32>
    %cst_20 = arith.constant 0.000000e+00 : f32
    %50 = vector.broadcast %cst_20 : f32 to vector<10x10x4xf32>
    %c0_21 = arith.constant 0 : index
    %c0_22 = arith.constant 0 : index
    %c0_23 = arith.constant 0 : index
    %51 = vector.load %arg9[%c0_21, %c0_22, %c0_23] : memref<10x10x4xf32, #tpu.memory_space<vmem>>, vector<10x10x4xf32>
    tpu.vector_store %arg9[%c0_21, %c0_22, %c0_23], %50 {strides = array<i32>} : memref<10x10x4xf32, #tpu.memory_space<vmem>>, vector<10x10x4xf32>,
    %c1_24 = arith.constant 1 : index
    %c1_25 = arith.constant 1 : index
    %c0_26 = arith.constant 0 : index
    %52 = vector.load %arg9[%c1_24, %c1_25, %c0_26] : memref<10x10x4xf32, #tpu.memory_space<vmem>>, vector<8x8x4xf32>
    tpu.vector_store %arg9[%c1_24, %c1_25, %c0_26], %38 {strides = array<i32>} : memref<10x10x4xf32, #tpu.memory_space<vmem>>, vector<8x8x4xf32>,
    %c0_27 = arith.constant 0 : index
    %c0_28 = arith.constant 0 : index
    %c0_29 = arith.constant 0 : index
    %53 = vector.load %arg9[%c0_27, %c0_28, %c0_29] : memref<10x10x4xf32, #tpu.memory_space<vmem>>, vector<10x10x4xf32>
    %54 = vector.extract_strided_slice %53 {offsets = [0, 0, 0], sizes = [8, 8, 4], strides = [1, 1, 1]} : vector<10x10x4xf32> to vector<8x8x4xf32>
    %55 = vector.extract_strided_slice %53 {offsets = [0, 1, 0], sizes = [8, 8, 4], strides = [1, 1, 1]} : vector<10x10x4xf32> to vector<8x8x4xf32>
    %56 = vector.extract_strided_slice %53 {offsets = [0, 2, 0], sizes = [8, 8, 4], strides = [1, 1, 1]} : vector<10x10x4xf32> to vector<8x8x4xf32>
    %57 = vector.extract_strided_slice %53 {offsets = [1, 0, 0], sizes = [8, 8, 4], strides = [1, 1, 1]} : vector<10x10x4xf32> to vector<8x8x4xf32>
    %58 = vector.extract_strided_slice %53 {offsets = [1, 1, 0], sizes = [8, 8, 4], strides = [1, 1, 1]} : vector<10x10x4xf32> to vector<8x8x4xf32>
    %59 = vector.extract_strided_slice %53 {offsets = [1, 2, 0], sizes = [8, 8, 4], strides = [1, 1, 1]} : vector<10x10x4xf32> to vector<8x8x4xf32>
    %60 = vector.extract_strided_slice %53 {offsets = [2, 0, 0], sizes = [8, 8, 4], strides = [1, 1, 1]} : vector<10x10x4xf32> to vector<8x8x4xf32>
    %61 = vector.extract_strided_slice %53 {offsets = [2, 1, 0], sizes = [8, 8, 4], strides = [1, 1, 1]} : vector<10x10x4xf32> to vector<8x8x4xf32>
    %62 = vector.extract_strided_slice %53 {offsets = [2, 2, 0], sizes = [8, 8, 4], strides = [1, 1, 1]} : vector<10x10x4xf32> to vector<8x8x4xf32>
    %63 = tpu.concatenate %54, %55, %56, %57, %58, %59, %60, %61, %62 in 2 : vector<8x8x4xf32>, vector<8x8x4xf32>, vector<8x8x4xf32>, vector<8x8x4xf32>, vector<8x8x4xf32>, vector<8x8x4xf32>, vector<8x8x4xf32>, vector<8x8x4xf32>, vector<8x8x4xf32> -> vector<8x8x36xf32>
    %64 = vector.shape_cast %63 : vector<8x8x36xf32> to vector<64x36xf32>
    %65 = arith.truncf %64 : vector<64x36xf32> to vector<64x36xbf16>
    %c0_30 = arith.constant 0 : index
    %c0_31 = arith.constant 0 : index
    %66 = vector.load %arg4[%c0_30, %c0_31] : memref<36x8xbf16, #tpu.memory_space<vmem>>, vector<36x8xbf16>
    %cst_32 = arith.constant dense<0.000000e+00> : vector<64x8xf32>
    %67 = tpu.matmul %65, %66, %cst_32 {dimension_numbers = #tpu.dot_dimension_numbers<[1], [0], [0], [1], [0, 0, 1, 1], [], []>} : vector<64x36xbf16>, vector<36x8xbf16>, vector<64x8xf32> -> vector<64x8xf32>
    %c0_33 = arith.constant 0 : index
    %c0_34 = arith.constant 0 : index
    %68 = vector.load %arg5[%c0_33, %c0_34] : memref<1x8xf32, #tpu.memory_space<vmem>>, vector<1x8xf32>
    %69 = vector.broadcast %68 : vector<1x8xf32> to vector<64x8xf32>
    %70 = arith.addf %67, %69 : vector<64x8xf32>
    %cst_35 = arith.constant 0.000000e+00 : f32
    %71 = vector.broadcast %cst_35 : f32 to vector<64x8xf32>
    %72 = arith.cmpf oge, %70, %71 : vector<64x8xf32>
    %cst_36 = arith.constant 2.000000e-01 : f32
    %73 = vector.broadcast %cst_36 : f32 to vector<64x8xf32>
    %74 = arith.mulf %73, %70 : vector<64x8xf32>
    %75 = arith.select %72, %70, %74 : vector<64x8xi1>, vector<64x8xf32>
    %76 = vector.shape_cast %49 : vector<8x8x4xf32> to vector<64x4xf32>
    %77 = arith.truncf %76 : vector<64x4xf32> to vector<64x4xbf16>
    %c0_37 = arith.constant 0 : index
    %c0_38 = arith.constant 0 : index
    %78 = vector.load %arg6[%c0_37, %c0_38] : memref<4x8xbf16, #tpu.memory_space<vmem>>, vector<4x8xbf16>
    %cst_39 = arith.constant dense<0.000000e+00> : vector<64x8xf32>
    %79 = tpu.matmul %77, %78, %cst_39 {dimension_numbers = #tpu.dot_dimension_numbers<[1], [0], [0], [1], [0, 0, 1, 1], [], []>} : vector<64x4xbf16>, vector<4x8xbf16>, vector<64x8xf32> -> vector<64x8xf32>
    %80 = arith.addf %75, %79 : vector<64x8xf32>
    %c0_40 = arith.constant 0 : index
    %c0_41 = arith.constant 0 : index
    %c0_42 = arith.constant 0 : index
    %81 = vector.load %arg7[%c0_40, %c0_41, %c0_42] : memref<1x64x8xf32, #tpu.memory_space<vmem>>, vector<1x64x8xf32>
    %82 = vector.shape_cast %81 : vector<1x64x8xf32> to vector<64x8xf32>
    %83 = vector.shape_cast %80 : vector<64x8xf32> to vector<1x64x8xf32>
    tpu.vector_store %arg7[%c0_40, %c0_41, %c0_42], %83 {strides = array<i32>} : memref<1x64x8xf32, #tpu.memory_space<vmem>>, vector<1x64x8xf32>,
    return
  }
  func.func @transform_0(%arg0: i32) -> (i32, i32, i32, i32) {
    %c0_i32 = arith.constant 0 : i32
    %c0_i32_0 = arith.constant 0 : i32
    %c0_i32_1 = arith.constant 0 : i32
    %c0_i32_2 = arith.constant 0 : i32
    return %arg0, %c0_i32, %c0_i32_0, %c0_i32_1 : i32, i32, i32, i32
  }
  func.func @transform_1(%arg0: i32) -> (i32, i32) {
    %c0_i32 = arith.constant 0 : i32
    %c0_i32_0 = arith.constant 0 : i32
    %c0_i32_1 = arith.constant 0 : i32
    return %c0_i32, %c0_i32_0 : i32, i32
  }
  func.func @transform_2(%arg0: i32) -> (i32, i32) {
    %c0_i32 = arith.constant 0 : i32
    %c0_i32_0 = arith.constant 0 : i32
    %c0_i32_1 = arith.constant 0 : i32
    return %c0_i32, %c0_i32_0 : i32, i32
  }
  func.func @transform_3(%arg0: i32) -> (i32, i32) {
    %c0_i32 = arith.constant 0 : i32
    %c0_i32_0 = arith.constant 0 : i32
    %c0_i32_1 = arith.constant 0 : i32
    return %c0_i32, %c0_i32_0 : i32, i32
  }
  func.func @transform_4(%arg0: i32) -> (i32, i32) {
    %c0_i32 = arith.constant 0 : i32
    %c0_i32_0 = arith.constant 0 : i32
    %c0_i32_1 = arith.constant 0 : i32
    return %c0_i32, %c0_i32_0 : i32, i32
  }
  func.func @transform_5(%arg0: i32) -> (i32, i32) {
    %c0_i32 = arith.constant 0 : i32
    %c0_i32_0 = arith.constant 0 : i32
    %c0_i32_1 = arith.constant 0 : i32
    return %c0_i32, %c0_i32_0 : i32, i32
  }
  func.func @transform_6(%arg0: i32) -> (i32, i32, i32) {
    %c0_i32 = arith.constant 0 : i32
    %c0_i32_0 = arith.constant 0 : i32
    %c0_i32_1 = arith.constant 0 : i32
    return %arg0, %c0_i32, %c0_i32_0 : i32, i32, i32
  }
}

</mosaic_0001>

<llo_original>
// kernel: tpu_custom_call.1
$region0: #{tpu_custom_call.1}
  #allocation0 [shape = 'u32[]', space=smem, size = 0x4, offset = 0x4, fixed_abs, tag = 'smem constant byte address 0x4 - core index']
  #allocation1 [shape = 'u32[72,128]{1,0:T(1,128)}', space=vmem, size = 0x9000, scoped, tag = 'internal scratch']
  #allocation2 [shape = 'f32[18,10,8]{2,1,0:T(8,128)}', space=vmem, size = 0x24000, scoped, tag = 'scratch operand']
  #allocation3 [shape = 'f32[10,10,4]{2,1,0:T(8,128)}', space=vmem, size = 0x14000, scoped, tag = 'scratch operand']
  %s0 = inlined_call_operand.vmem [shape: f32[2,16,8,8], index: 0, kind: input, shape index: {}]
  %s1 = inlined_call_operand.vmem [shape: bf16[72,8], index: 1, kind: input, shape index: {}]
  %s2 = inlined_call_operand.vmem [shape: f32[1,8], index: 2, kind: input, shape index: {}]
  %s3 = inlined_call_operand.vmem [shape: bf16[36,8], index: 3, kind: input, shape index: {}]
  %s4 = inlined_call_operand.vmem [shape: f32[1,8], index: 4, kind: input, shape index: {}]
  %s5 = inlined_call_operand.vmem [shape: bf16[4,8], index: 5, kind: input, shape index: {}]
  %s6 = inlined_call_operand.vmem [shape: f32[2,64,8], index: 6, kind: output, shape index: {}]
  %s7 = sld [smem:[#allocation0]]
  $region57: #{tpu_custom_call.1} parent=0
    _
  %s9 = ssub.s32 1, %s7
  %s10 = scalar_select 0, %s9, %s7
  loop: start=0, step=1, limit=4
  $region2: #{tpu_custom_call.1} parent=0 // loop_pre_header
    _
  $region3: #{tpu_custom_call.1} parent=0 // loop_header
    %s12 = sphi 0, %s16
    %p13 = scmp.ge.s32.totalorder %s12, 4
    %s22 = sphi 0, %s24
    %s25 = sphi 0, %s22
    %s26 = sphi 0, %s25
    %s42 = sphi 0, %s26
    %s46 = sphi 0, %s46
    %s48 = sphi 0, %s46
    %s49 = sphi 0, %s48
    %s63 = sphi 0, %s49
    %s67 = sphi 0, %s67
    %s69 = sphi 0, %s67
    %s70 = sphi 0, %s69
    %s84 = sphi 0, %s70
    %s88 = sphi 0, %s88
    %s90 = sphi 0, %s88
    %s91 = sphi 0, %s90
    %s105 = sphi 0, %s91
    %s109 = sphi 0, %s109
    %s111 = sphi 0, %s109
    %s112 = sphi 0, %s111
    %s126 = sphi 0, %s112
    %s130 = sphi 0, %s130
    %s132 = sphi 0, %s130
    %s133 = sphi 0, %s132
    %s147 = sphi 0, %s133
    %s153 = sphi 0, %s155
    %s156 = sphi 0, %s153
    %s157 = sphi 0, %s156
    %s173 = sphi 0, %s157
  $region4: #{tpu_custom_call.1} parent=0 // loop_header_branch
    %15 = sbr.rel (%p13) target = $region8
  $region5: #{tpu_custom_call.1} parent=0 // loop_body
    %s17 = ssub.s32 %s12, 1
    %s18 = ssub.s32 %s12, 2
    %s19 = sadd.s32 %s12, 1
    %s20 = ssub.s32 %s12, %s19
    %p21 = scmp.eq.s32.totalorder %s20, 0
    %s23 = sadd.s32 %s22, 1
    %s24 = scalar_select %p21, %s22, %s23
    %p27 = pneg %p21
    %p28 = scmp.eq.s32.totalorder %s12, 1
    %p29 = por %p27, %p28
    %p30 = scmp.ne.s32.totalorder %s22, %s25
    %p31 = scmp.eq.s32.totalorder %s12, 0
    %p32 = por %p30, %p31
    %p33 = scmp.ne.s32.totalorder %s22, %s25
    %p34 = scmp.eq.s32.totalorder %s17, 1
    %p35 = por %p33, %p34
    %p36 = scmp.ne.s32.totalorder %s25, %s26
    %p37 = scmp.eq.s32.totalorder %s17, 0
    %p38 = por %p36, %p37
    %p39 = scmp.ne.s32.totalorder %s25, %s26
    %p40 = scmp.eq.s32.totalorder %s18, 1
    %p41 = por %p39, %p40
    %p43 = scmp.ne.s32.totalorder %s26, %s42
    %p44 = scmp.eq.s32.totalorder %s18, 0
    %p45 = por %p43, %p44
    %s47 = sadd.s32 %s46, 1
    %p50 = scmp.eq.s32.totalorder %s12, 1
    %p51 = scmp.ne.s32.totalorder %s46, %s48
    %p52 = scmp.eq.s32.totalorder %s12, 0
    %p53 = por %p51, %p52
    %p54 = scmp.ne.s32.totalorder %s46, %s48
    %p55 = scmp.eq.s32.totalorder %s17, 1
    %p56 = por %p54, %p55
    %p57 = scmp.ne.s32.totalorder %s48, %s49
    %p58 = scmp.eq.s32.totalorder %s17, 0
    %p59 = por %p57, %p58
    %p60 = scmp.ne.s32.totalorder %s48, %s49
    %p61 = scmp.eq.s32.totalorder %s18, 1
    %p62 = por %p60, %p61
    %p64 = scmp.ne.s32.totalorder %s49, %s63
    %p65 = scmp.eq.s32.totalorder %s18, 0
    %p66 = por %p64, %p65
    %s68 = sadd.s32 %s67, 1
    %p71 = scmp.eq.s32.totalorder %s12, 1
    %p72 = scmp.ne.s32.totalorder %s67, %s69
    %p73 = scmp.eq.s32.totalorder %s12, 0
    %p74 = por %p72, %p73
    %p75 = scmp.ne.s32.totalorder %s67, %s69
    %p76 = scmp.eq.s32.totalorder %s17, 1
    %p77 = por %p75, %p76
    %p78 = scmp.ne.s32.totalorder %s69, %s70
    %p79 = scmp.eq.s32.totalorder %s17, 0
    %p80 = por %p78, %p79
    %p81 = scmp.ne.s32.totalorder %s69, %s70
    %p82 = scmp.eq.s32.totalorder %s18, 1
    %p83 = por %p81, %p82
    %p85 = scmp.ne.s32.totalorder %s70, %s84
    %p86 = scmp.eq.s32.totalorder %s18, 0
    %p87 = por %p85, %p86
    %s89 = sadd.s32 %s88, 1
    %p92 = scmp.eq.s32.totalorder %s12, 1
    %p93 = scmp.ne.s32.totalorder %s88, %s90
    %p94 = scmp.eq.s32.totalorder %s12, 0
    %p95 = por %p93, %p94
    %p96 = scmp.ne.s32.totalorder %s88, %s90
    %p97 = scmp.eq.s32.totalorder %s17, 1
    %p98 = por %p96, %p97
    %p99 = scmp.ne.s32.totalorder %s90, %s91
    %p100 = scmp.eq.s32.totalorder %s17, 0
    %p101 = por %p99, %p100
    %p102 = scmp.ne.s32.totalorder %s90, %s91
    %p103 = scmp.eq.s32.totalorder %s18, 1
    %p104 = por %p102, %p103
    %p106 = scmp.ne.s32.totalorder %s91, %s105
    %p107 = scmp.eq.s32.totalorder %s18, 0
    %p108 = por %p106, %p107
    %s110 = sadd.s32 %s109, 1
    %p113 = scmp.eq.s32.totalorder %s12, 1
    %p114 = scmp.ne.s32.totalorder %s109, %s111
    %p115 = scmp.eq.s32.totalorder %s12, 0
    %p116 = por %p114, %p115
    %p117 = scmp.ne.s32.totalorder %s109, %s111
    %p118 = scmp.eq.s32.totalorder %s17, 1
    %p119 = por %p117, %p118
    %p120 = scmp.ne.s32.totalorder %s111, %s112
    %p121 = scmp.eq.s32.totalorder %s17, 0
    %p122 = por %p120, %p121
    %p123 = scmp.ne.s32.totalorder %s111, %s112
    %p124 = scmp.eq.s32.totalorder %s18, 1
    %p125 = por %p123, %p124
    %p127 = scmp.ne.s32.totalorder %s112, %s126
    %p128 = scmp.eq.s32.totalorder %s18, 0
    %p129 = por %p127, %p128
    %s131 = sadd.s32 %s130, 1
    %p134 = scmp.eq.s32.totalorder %s12, 1
    %p135 = scmp.ne.s32.totalorder %s130, %s132
    %p136 = scmp.eq.s32.totalorder %s12, 0
    %p137 = por %p135, %p136
    %p138 = scmp.ne.s32.totalorder %s130, %s132
    %p139 = scmp.eq.s32.totalorder %s17, 1
    %p140 = por %p138, %p139
    %p141 = scmp.ne.s32.totalorder %s132, %s133
    %p142 = scmp.eq.s32.totalorder %s17, 0
    %p143 = por %p141, %p142
    %p144 = scmp.ne.s32.totalorder %s132, %s133
    %p145 = scmp.eq.s32.totalorder %s18, 1
    %p146 = por %p144, %p145
    %p148 = scmp.ne.s32.totalorder %s133, %s147
    %p149 = scmp.eq.s32.totalorder %s18, 0
    %p150 = por %p148, %p149
    %s151 = ssub.s32 %s12, %s19
    %p152 = scmp.eq.s32.totalorder %s151, 0
    %s154 = sadd.s32 %s153, 1
    %s155 = scalar_select %p152, %s153, %s154
    %p158 = pneg %p152
    %p159 = scmp.eq.s32.totalorder %s12, 1
    %p160 = por %p158, %p159
    %p161 = scmp.ne.s32.totalorder %s153, %s156
    %p162 = scmp.eq.s32.totalorder %s12, 0
    %p163 = por %p161, %p162
    %p164 = scmp.ne.s32.totalorder %s153, %s156
    %p165 = scmp.eq.s32.totalorder %s17, 1
    %p166 = por %p164, %p165
    %p167 = scmp.ne.s32.totalorder %s156, %s157
    %p168 = scmp.eq.s32.totalorder %s17, 0
    %p169 = por %p167, %p168
    %p170 = scmp.ne.s32.totalorder %s156, %s157
    %p171 = scmp.eq.s32.totalorder %s18, 1
    %p172 = por %p170, %p171
    %p174 = scmp.ne.s32.totalorder %s157, %s173
    %p175 = scmp.eq.s32.totalorder %s18, 0
    %p176 = por %p174, %p175
    %p177 = scmp.le.s32.totalorder 1, %s12
    %p178 = scmp.lt.s32.totalorder %s12, 3
    %p179 = pnand %p177, %p178
    %p180 = pneg %p179
    // Predicated region
    $region9: #{tpu_custom_call.1} parent=5 // pred_check
      _
    $region10: #{tpu_custom_call.1} parent=5 // pred_check_branch
      %182 = sbr.rel (%p179) target = $region12
    $region11: #{tpu_custom_call.1} parent=5 // pred_region
      %s183 = ssub.s32 %s12, 1
      // Predicated region
      $region13: #{tpu_custom_call.1} parent=11 // pred_check
        %p184 = pneg %p59
      $region14: #{tpu_custom_call.1} parent=11 // pred_check_branch
        %186 = sbr.rel (%p184) target = $region16
      $region15: #{tpu_custom_call.1} parent=11 // pred_region
        _
      $region16: #{tpu_custom_call.1} parent=11 // pred_fallthru
        _
      // Predicated region
      $region17: #{tpu_custom_call.1} parent=11 // pred_check
        %p187 = pneg %p80
      $region18: #{tpu_custom_call.1} parent=11 // pred_check_branch
        %189 = sbr.rel (%p187) target = $region20
      $region19: #{tpu_custom_call.1} parent=11 // pred_region
        _
      $region20: #{tpu_custom_call.1} parent=11 // pred_fallthru
        _
      // Predicated region
      $region21: #{tpu_custom_call.1} parent=11 // pred_check
        %p190 = pneg %p101
      $region22: #{tpu_custom_call.1} parent=11 // pred_check_branch
        %192 = sbr.rel (%p190) target = $region24
      $region23: #{tpu_custom_call.1} parent=11 // pred_region
        _
      $region24: #{tpu_custom_call.1} parent=11 // pred_fallthru
        _
      // Predicated region
      $region25: #{tpu_custom_call.1} parent=11 // pred_check
        %p193 = pneg %p122
      $region26: #{tpu_custom_call.1} parent=11 // pred_check_branch
        %195 = sbr.rel (%p193) target = $region28
      $region27: #{tpu_custom_call.1} parent=11 // pred_region
        _
      $region28: #{tpu_custom_call.1} parent=11 // pred_fallthru
        _
      // Predicated region
      $region29: #{tpu_custom_call.1} parent=11 // pred_check
        %p196 = pneg %p143
      $region30: #{tpu_custom_call.1} parent=11 // pred_check_branch
        %198 = sbr.rel (%p196) target = $region32
      $region31: #{tpu_custom_call.1} parent=11 // pred_region
        _
      $region32: #{tpu_custom_call.1} parent=11 // pred_fallthru
        _
    $region12: #{tpu_custom_call.1} parent=5 // pred_fallthru
      _
    %p199 = scmp.lt.s32.totalorder %s12, 2
    // Predicated region
    $region33: #{tpu_custom_call.1} parent=5 // pred_check
      %p200 = pneg %p199
    $region34: #{tpu_custom_call.1} parent=5 // pred_check_branch
      %202 = sbr.rel (%p200) target = $region36
    $region35: #{tpu_custom_call.1} parent=5 // pred_region
      // Predicated region
      $region37: #{tpu_custom_call.1} parent=35 // pred_check
        %p203 = pneg %p32
      $region38: #{tpu_custom_call.1} parent=35 // pred_check_branch
        %205 = sbr.rel (%p203) target = $region40
      $region39: #{tpu_custom_call.1} parent=35 // pred_region
        %p206 = scmp.lt.s32.totalorder %s12, 1
        %s207 = scalar_select %p206, %s12, 1
        %s208 = smul.addr %s207, 16
        %s209 = smul.addr %s208, 8
        %s210 = scalar_lea.vmem %s0, %s209
      $region40: #{tpu_custom_call.1} parent=35 // pred_fallthru
        _
    $region36: #{tpu_custom_call.1} parent=5 // pred_fallthru
      _
    %p211 = scmp.le.s32.totalorder 1, %s12
    %p212 = scmp.lt.s32.totalorder %s12, 3
    %p213 = pnand %p211, %p212
    %p214 = pneg %p213
    // Predicated region
    $region41: #{tpu_custom_call.1} parent=5 // pred_check
      _
    $region42: #{tpu_custom_call.1} parent=5 // pred_check_branch
      %216 = sbr.rel (%p213) target = $region44
    $region43: #{tpu_custom_call.1} parent=5 // pred_region
      %s217 = ssub.s32 %s12, 1
      %p218 = scmp.lt.s32.totalorder %s17, 1
      %s219 = scalar_select %p218, %s17, 1
      %s220 = smul.addr %s219, 16
      %s221 = smul.addr %s220, 8
      %s222 = scalar_lea.vmem %s0, %s221
      %p223 = pneg %p38
      %p224 = pneg %p35
      %p225 = pneg %p59
      %p226 = pneg %p56
      %p227 = pneg %p80
      %p228 = pneg %p77
      %p229 = pneg %p101
      %p230 = pneg %p98
      %p231 = pneg %p122
      %p232 = pneg %p119
      %p233 = pneg %p143
      %p234 = pneg %p140
      %p235 = pneg %p169
      %p236 = pneg %p166
      %p237 = scmp.lt.s32.totalorder %s17, 1
      %s238 = scalar_select %p237, %s17, 1
      %s239 = smul.addr %s238, 8
      %s240 = smul.addr %s239, 8
      %s241 = scalar_lea.vmem %s6, %s240
      %p242 = scmp.lt.s32.totalorder %s17, 1
      %s243 = scalar_select %p242, %s17, 1
      %s244 = smul.addr %s243, 16
      %s245 = smul.addr %s244, 8
      %s246 = scalar_lea.vmem %s0, %s245
      %p247 = scmp.lt.s32.totalorder %s17, 1
      %s248 = scalar_select %p247, %s17, 1
      %s249 = smul.addr %s248, 8
      %s250 = smul.addr %s249, 8
      %s251 = scalar_lea.vmem %s6, %s250
      %v253 = vld [vmem:[%s246] sm:$0xff]
      %v254 = vld [vmem:[%s246 + $0x8] sm:$0xff]
      %v255 = vld [vmem:[%s246 + $0x10] sm:$0xff]
      %v256 = vld [vmem:[%s246 + $0x18] sm:$0xff]
      %v257 = vld [vmem:[%s246 + $0x20] sm:$0xff]
      %v258 = vld [vmem:[%s246 + $0x28] sm:$0xff]
      %v259 = vld [vmem:[%s246 + $0x30] sm:$0xff]
      %v260 = vld [vmem:[%s246 + $0x38] sm:$0xff]
      %v261 = vld [vmem:[%s246 + $0x40] sm:$0xff]
      %v262 = vld [vmem:[%s246 + $0x48] sm:$0xff]
      %v263 = vld [vmem:[%s246 + $0x50] sm:$0xff]
      %v264 = vld [vmem:[%s246 + $0x58] sm:$0xff]
      %v265 = vld [vmem:[%s246 + $0x60] sm:$0xff]
      %v266 = vld [vmem:[%s246 + $0x68] sm:$0xff]
      %v267 = vld [vmem:[%s246 + $0x70] sm:$0xff]
      %v268 = vld [vmem:[%s246 + $0x78] sm:$0xff]
      %vm269 = vcmask 64512
      %270 = vst.msk [vmem:[#allocation2] sm:$0xff] %vm269, 0.0
      %vm271 = vcmask 58368
      %272 = vst.msk [vmem:[#allocation2 + $0x8] sm:$0x3] %vm271, 0.0
      %273 = vst.msk [vmem:[#allocation2 + $0x10] sm:$0xff] %vm269, 0.0
      %274 = vst.msk [vmem:[#allocation2 + $0x18] sm:$0x3] %vm271, 0.0
      %275 = vst.msk [vmem:[#allocation2 + $0x20] sm:$0xff] %vm269, 0.0
      %276 = vst.msk [vmem:[#allocation2 + $0x28] sm:$0x3] %vm271, 0.0
      %277 = vst.msk [vmem:[#allocation2 + $0x30] sm:$0xff] %vm269, 0.0
      %278 = vst.msk [vmem:[#allocation2 + $0x38] sm:$0x3] %vm271, 0.0
      %279 = vst.msk [vmem:[#allocation2 + $0x40] sm:$0xff] %vm269, 0.0
      %280 = vst.msk [vmem:[#allocation2 + $0x48] sm:$0x3] %vm271, 0.0
      %281 = vst.msk [vmem:[#allocation2 + $0x50] sm:$0xff] %vm269, 0.0
      %282 = vst.msk [vmem:[#allocation2 + $0x58] sm:$0x3] %vm271, 0.0
      %283 = vst.msk [vmem:[#allocation2 + $0x60] sm:$0xff] %vm269, 0.0
      %284 = vst.msk [vmem:[#allocation2 + $0x68] sm:$0x3] %vm271, 0.0
      %285 = vst.msk [vmem:[#allocation2 + $0x70] sm:$0xff] %vm269, 0.0
      %286 = vst.msk [vmem:[#allocation2 + $0x78] sm:$0x3] %vm271, 0.0
      %287 = vst.msk [vmem:[#allocation2 + $0x80] sm:$0xff] %vm269, 0.0
      %288 = vst.msk [vmem:[#allocation2 + $0x88] sm:$0x3] %vm271, 0.0
      %289 = vst.msk [vmem:[#allocation2 + $0x90] sm:$0xff] %vm269, 0.0
      %290 = vst.msk [vmem:[#allocation2 + $0x98] sm:$0x3] %vm271, 0.0
      %291 = vst.msk [vmem:[#allocation2 + $0xa0] sm:$0xff] %vm269, 0.0
      %292 = vst.msk [vmem:[#allocation2 + $0xa8] sm:$0x3] %vm271, 0.0
      %293 = vst.msk [vmem:[#allocation2 + $0xb0] sm:$0xff] %vm269, 0.0
      %294 = vst.msk [vmem:[#allocation2 + $0xb8] sm:$0x3] %vm271, 0.0
      %295 = vst.msk [vmem:[#allocation2 + $0xc0] sm:$0xff] %vm269, 0.0
      %296 = vst.msk [vmem:[#allocation2 + $0xc8] sm:$0x3] %vm271, 0.0
      %297 = vst.msk [vmem:[#allocation2 + $0xd0] sm:$0xff] %vm269, 0.0
      %298 = vst.msk [vmem:[#allocation2 + $0xd8] sm:$0x3] %vm271, 0.0
      %299 = vst.msk [vmem:[#allocation2 + $0xe0] sm:$0xff] %vm269, 0.0
      %300 = vst.msk [vmem:[#allocation2 + $0xe8] sm:$0x3] %vm271, 0.0
      %301 = vst.msk [vmem:[#allocation2 + $0xf0] sm:$0xff] %vm269, 0.0
      %302 = vst.msk [vmem:[#allocation2 + $0xf8] sm:$0x3] %vm271, 0.0
      %303 = vst.msk [vmem:[#allocation2 + $0x100] sm:$0xff] %vm269, 0.0
      %304 = vst.msk [vmem:[#allocation2 + $0x108] sm:$0x3] %vm271, 0.0
      %305 = vst.msk [vmem:[#allocation2 + $0x110] sm:$0xff] %vm269, 0.0
      %306 = vst.msk [vmem:[#allocation2 + $0x118] sm:$0x3] %vm271, 0.0
      %s307 = scalar_lea.vmem [#allocation2], 16
      %308 = vst.msk [vmem:[%s307 + $0x1] sm:$0xff] %vm269, %v253
      %309 = vst.msk [vmem:[%s307 + $0x11] sm:$0xff] %vm269, %v254
      %310 = vst.msk [vmem:[%s307 + $0x21] sm:$0xff] %vm269, %v255
      %311 = vst.msk [vmem:[%s307 + $0x31] sm:$0xff] %vm269, %v256
      %312 = vst.msk [vmem:[%s307 + $0x41] sm:$0xff] %vm269, %v257
      %313 = vst.msk [vmem:[%s307 + $0x51] sm:$0xff] %vm269, %v258
      %314 = vst.msk [vmem:[%s307 + $0x61] sm:$0xff] %vm269, %v259
      %315 = vst.msk [vmem:[%s307 + $0x71] sm:$0xff] %vm269, %v260
      %316 = vst.msk [vmem:[%s307 + $0x81] sm:$0xff] %vm269, %v261
      %317 = vst.msk [vmem:[%s307 + $0x91] sm:$0xff] %vm269, %v262
      %318 = vst.msk [vmem:[%s307 + $0xa1] sm:$0xff] %vm269, %v263
      %319 = vst.msk [vmem:[%s307 + $0xb1] sm:$0xff] %vm269, %v264
      %320 = vst.msk [vmem:[%s307 + $0xc1] sm:$0xff] %vm269, %v265
      %321 = vst.msk [vmem:[%s307 + $0xd1] sm:$0xff] %vm269, %v266
      %322 = vst.msk [vmem:[%s307 + $0xe1] sm:$0xff] %vm269, %v267
      %323 = vst.msk [vmem:[%s307 + $0xf1] sm:$0xff] %vm269, %v268
      %v324 = vld [vmem:[#allocation2] sm:$0xff]
      %v325 = vld [vmem:[#allocation2 + $0x8] sm:$0x3]
      %v326 = vld [vmem:[#allocation2 + $0x10] sm:$0xff]
      %v327 = vld [vmem:[#allocation2 + $0x18] sm:$0x3]
      %v328 = vld [vmem:[#allocation2 + $0x20] sm:$0xff]
      %v329 = vld [vmem:[#allocation2 + $0x28] sm:$0x3]
      %v330 = vld [vmem:[#allocation2 + $0x30] sm:$0xff]
      %v331 = vld [vmem:[#allocation2 + $0x38] sm:$0x3]
      %v332 = vld [vmem:[#allocation2 + $0x40] sm:$0xff]
      %v333 = vld [vmem:[#allocation2 + $0x48] sm:$0x3]
      %v334 = vld [vmem:[#allocation2 + $0x50] sm:$0xff]
      %v335 = vld [vmem:[#allocation2 + $0x58] sm:$0x3]
      %v336 = vld [vmem:[#allocation2 + $0x60] sm:$0xff]
      %v337 = vld [vmem:[#allocation2 + $0x68] sm:$0x3]
      %v338 = vld [vmem:[#allocation2 + $0x70] sm:$0xff]
      %v339 = vld [vmem:[#allocation2 + $0x78] sm:$0x3]
      %v340 = vld [vmem:[#allocation2 + $0x80] sm:$0xff]
      %v341 = vld [vmem:[#allocation2 + $0x88] sm:$0x3]
      %v342 = vld [vmem:[#allocation2 + $0x90] sm:$0xff]
      %v343 = vld [vmem:[#allocation2 + $0x98] sm:$0x3]
      %v344 = vld [vmem:[#allocation2 + $0xa0] sm:$0xff]
      %v345 = vld [vmem:[#allocation2 + $0xa8] sm:$0x3]
      %v346 = vld [vmem:[#allocation2 + $0xb0] sm:$0xff]
      %v347 = vld [vmem:[#allocation2 + $0xb8] sm:$0x3]
      %v348 = vld [vmem:[#allocation2 + $0xc0] sm:$0xff]
      %v349 = vld [vmem:[#allocation2 + $0xc8] sm:$0x3]
      %v350 = vld [vmem:[#allocation2 + $0xd0] sm:$0xff]
      %v351 = vld [vmem:[#allocation2 + $0xd8] sm:$0x3]
      %v352 = vld [vmem:[#allocation2 + $0xe0] sm:$0xff]
      %v353 = vld [vmem:[#allocation2 + $0xe8] sm:$0x3]
      %v354 = vld [vmem:[#allocation2 + $0xf0] sm:$0xff]
      %v355 = vld [vmem:[#allocation2 + $0xf8] sm:$0x3]
      %v356 = vld [vmem:[#allocation2 + $0x100] sm:$0xff]
      %v357 = vld [vmem:[#allocation2 + $0x108] sm:$0x3]
      %v358 = vld [vmem:[#allocation2 + $0x110] sm:$0xff]
      %v359 = vld [vmem:[#allocation2 + $0x118] sm:$0x3]
      %vm392 = vcmask 1046528
      %v393 = vrot.slane %v324, 1
      %v394 = vrot.slane %v325, 1
      %v395 = vsel %vm392, %v393, %v394
      %v396 = vrot.slane %v326, 1
      %v397 = vrot.slane %v327, 1
      %v398 = vsel %vm392, %v396, %v397
      %v399 = vrot.slane %v328, 1
      %v400 = vrot.slane %v329, 1
      %v401 = vsel %vm392, %v399, %v400
      %v402 = vrot.slane %v330, 1
      %v403 = vrot.slane %v331, 1
      %v404 = vsel %vm392, %v402, %v403
      %v405 = vrot.slane %v332, 1
      %v406 = vrot.slane %v333, 1
      %v407 = vsel %vm392, %v405, %v406
      %v408 = vrot.slane %v334, 1
      %v409 = vrot.slane %v335, 1
      %v410 = vsel %vm392, %v408, %v409
      %v411 = vrot.slane %v336, 1
      %v412 = vrot.slane %v337, 1
      %v413 = vsel %vm392, %v411, %v412
      %v414 = vrot.slane %v338, 1
      %v415 = vrot.slane %v339, 1
      %v416 = vsel %vm392, %v414, %v415
      %v417 = vrot.slane %v340, 1
      %v418 = vrot.slane %v341, 1
      %v419 = vsel %vm392, %v417, %v418
      %v420 = vrot.slane %v342, 1
      %v421 = vrot.slane %v343, 1
      %v422 = vsel %vm392, %v420, %v421
      %v423 = vrot.slane %v344, 1
      %v424 = vrot.slane %v345, 1
      %v425 = vsel %vm392, %v423, %v424
      %v426 = vrot.slane %v346, 1
      %v427 = vrot.slane %v347, 1
      %v428 = vsel %vm392, %v426, %v427
      %v429 = vrot.slane %v348, 1
      %v430 = vrot.slane %v349, 1
      %v431 = vsel %vm392, %v429, %v430
      %v432 = vrot.slane %v350, 1
      %v433 = vrot.slane %v351, 1
      %v434 = vsel %vm392, %v432, %v433
      %v435 = vrot.slane %v352, 1
      %v436 = vrot.slane %v353, 1
      %v437 = vsel %vm392, %v435, %v436
      %v438 = vrot.slane %v354, 1
      %v439 = vrot.slane %v355, 1
      %v440 = vsel %vm392, %v438, %v439
      %441 = vrot.lane.b32.xlu0 %v395, 8
      %v442 = vpop.permute.xlu0 %441
      %443 = vrot.lane.b32.xlu0 %v398, 8
      %v444 = vpop.permute.xlu0 %443
      %445 = vrot.lane.b32.xlu0 %v401, 8
      %v446 = vpop.permute.xlu0 %445
      %447 = vrot.lane.b32.xlu0 %v404, 8
      %v448 = vpop.permute.xlu0 %447
      %449 = vrot.lane.b32.xlu0 %v407, 8
      %v450 = vpop.permute.xlu0 %449
      %451 = vrot.lane.b32.xlu0 %v410, 8
      %v452 = vpop.permute.xlu0 %451
      %453 = vrot.lane.b32.xlu0 %v413, 8
      %v454 = vpop.permute.xlu0 %453
      %455 = vrot.lane.b32.xlu0 %v416, 8
      %v456 = vpop.permute.xlu0 %455
      %457 = vrot.lane.b32.xlu0 %v419, 8
      %v458 = vpop.permute.xlu0 %457
      %459 = vrot.lane.b32.xlu0 %v422, 8
      %v460 = vpop.permute.xlu0 %459
      %461 = vrot.lane.b32.xlu0 %v425, 8
      %v462 = vpop.permute.xlu0 %461
      %463 = vrot.lane.b32.xlu0 %v428, 8
      %v464 = vpop.permute.xlu0 %463
      %465 = vrot.lane.b32.xlu0 %v431, 8
      %v466 = vpop.permute.xlu0 %465
      %467 = vrot.lane.b32.xlu0 %v434, 8
      %v468 = vpop.permute.xlu0 %467
      %469 = vrot.lane.b32.xlu0 %v437, 8
      %v470 = vpop.permute.xlu0 %469
      %471 = vrot.lane.b32.xlu0 %v440, 8
      %v472 = vpop.permute.xlu0 %471
      %vm489 = vcmask 1045504
      %v490 = vrot.slane %v324, 2
      %v491 = vrot.slane %v325, 2
      %v492 = vsel %vm489, %v490, %v491
      %v493 = vrot.slane %v326, 2
      %v494 = vrot.slane %v327, 2
      %v495 = vsel %vm489, %v493, %v494
      %v496 = vrot.slane %v328, 2
      %v497 = vrot.slane %v329, 2
      %v498 = vsel %vm489, %v496, %v497
      %v499 = vrot.slane %v330, 2
      %v500 = vrot.slane %v331, 2
      %v501 = vsel %vm489, %v499, %v500
      %v502 = vrot.slane %v332, 2
      %v503 = vrot.slane %v333, 2
      %v504 = vsel %vm489, %v502, %v503
      %v505 = vrot.slane %v334, 2
      %v506 = vrot.slane %v335, 2
      %v507 = vsel %vm489, %v505, %v506
      %v508 = vrot.slane %v336, 2
      %v509 = vrot.slane %v337, 2
      %v510 = vsel %vm489, %v508, %v509
      %v511 = vrot.slane %v338, 2
      %v512 = vrot.slane %v339, 2
      %v513 = vsel %vm489, %v511, %v512
      %v514 = vrot.slane %v340, 2
      %v515 = vrot.slane %v341, 2
      %v516 = vsel %vm489, %v514, %v515
      %v517 = vrot.slane %v342, 2
      %v518 = vrot.slane %v343, 2
      %v519 = vsel %vm489, %v517, %v518
      %v520 = vrot.slane %v344, 2
      %v521 = vrot.slane %v345, 2
      %v522 = vsel %vm489, %v520, %v521
      %v523 = vrot.slane %v346, 2
      %v524 = vrot.slane %v347, 2
      %v525 = vsel %vm489, %v523, %v524
      %v526 = vrot.slane %v348, 2
      %v527 = vrot.slane %v349, 2
      %v528 = vsel %vm489, %v526, %v527
      %v529 = vrot.slane %v350, 2
      %v530 = vrot.slane %v351, 2
      %v531 = vsel %vm489, %v529, %v530
      %v532 = vrot.slane %v352, 2
      %v533 = vrot.slane %v353, 2
      %v534 = vsel %vm489, %v532, %v533
      %v535 = vrot.slane %v354, 2
      %v536 = vrot.slane %v355, 2
      %v537 = vsel %vm489, %v535, %v536
      %538 = vrot.lane.b32.xlu0 %v492, 16
      %v539 = vpop.permute.xlu0 %538
      %540 = vrot.lane.b32.xlu0 %v495, 16
      %v541 = vpop.permute.xlu0 %540
      %542 = vrot.lane.b32.xlu0 %v498, 16
      %v543 = vpop.permute.xlu0 %542
      %544 = vrot.lane.b32.xlu0 %v501, 16
      %v545 = vpop.permute.xlu0 %544
      %546 = vrot.lane.b32.xlu0 %v504, 16
      %v547 = vpop.permute.xlu0 %546
      %548 = vrot.lane.b32.xlu0 %v507, 16
      %v549 = vpop.permute.xlu0 %548
      %550 = vrot.lane.b32.xlu0 %v510, 16
      %v551 = vpop.permute.xlu0 %550
      %552 = vrot.lane.b32.xlu0 %v513, 16
      %v553 = vpop.permute.xlu0 %552
      %554 = vrot.lane.b32.xlu0 %v516, 16
      %v555 = vpop.permute.xlu0 %554
      %556 = vrot.lane.b32.xlu0 %v519, 16
      %v557 = vpop.permute.xlu0 %556
      %558 = vrot.lane.b32.xlu0 %v522, 16
      %v559 = vpop.permute.xlu0 %558
      %560 = vrot.lane.b32.xlu0 %v525, 16
      %v561 = vpop.permute.xlu0 %560
      %562 = vrot.lane.b32.xlu0 %v528, 16
      %v563 = vpop.permute.xlu0 %562
      %564 = vrot.lane.b32.xlu0 %v531, 16
      %v565 = vpop.permute.xlu0 %564
      %566 = vrot.lane.b32.xlu0 %v534, 16
      %v567 = vpop.permute.xlu0 %566
      %568 = vrot.lane.b32.xlu0 %v537, 16
      %v569 = vpop.permute.xlu0 %568
      %587 = vrot.lane.b32.xlu0 %v326, 24
      %v588 = vpop.permute.xlu0 %587
      %589 = vrot.lane.b32.xlu0 %v328, 24
      %v590 = vpop.permute.xlu0 %589
      %591 = vrot.lane.b32.xlu0 %v330, 24
      %v592 = vpop.permute.xlu0 %591
      %593 = vrot.lane.b32.xlu0 %v332, 24
      %v594 = vpop.permute.xlu0 %593
      %595 = vrot.lane.b32.xlu0 %v334, 24
      %v596 = vpop.permute.xlu0 %595
      %597 = vrot.lane.b32.xlu0 %v336, 24
      %v598 = vpop.permute.xlu0 %597
      %599 = vrot.lane.b32.xlu0 %v338, 24
      %v600 = vpop.permute.xlu0 %599
      %601 = vrot.lane.b32.xlu0 %v340, 24
      %v602 = vpop.permute.xlu0 %601
      %603 = vrot.lane.b32.xlu0 %v342, 24
      %v604 = vpop.permute.xlu0 %603
      %605 = vrot.lane.b32.xlu0 %v344, 24
      %v606 = vpop.permute.xlu0 %605
      %607 = vrot.lane.b32.xlu0 %v346, 24
      %v608 = vpop.permute.xlu0 %607
      %609 = vrot.lane.b32.xlu0 %v348, 24
      %v610 = vpop.permute.xlu0 %609
      %611 = vrot.lane.b32.xlu0 %v350, 24
      %v612 = vpop.permute.xlu0 %611
      %613 = vrot.lane.b32.xlu0 %v352, 24
      %v614 = vpop.permute.xlu0 %613
      %615 = vrot.lane.b32.xlu0 %v354, 24
      %v616 = vpop.permute.xlu0 %615
      %617 = vrot.lane.b32.xlu0 %v356, 24
      %v618 = vpop.permute.xlu0 %617
      %v636 = vrot.slane %v356, 1
      %v637 = vrot.slane %v357, 1
      %v638 = vsel %vm392, %v636, %v637
      %639 = vrot.lane.b32.xlu0 %v398, 32
      %v640 = vpop.permute.xlu0 %639
      %641 = vrot.lane.b32.xlu0 %v401, 32
      %v642 = vpop.permute.xlu0 %641
      %643 = vrot.lane.b32.xlu0 %v404, 32
      %v644 = vpop.permute.xlu0 %643
      %645 = vrot.lane.b32.xlu0 %v407, 32
      %v646 = vpop.permute.xlu0 %645
      %647 = vrot.lane.b32.xlu0 %v410, 32
      %v648 = vpop.permute.xlu0 %647
      %649 = vrot.lane.b32.xlu0 %v413, 32
      %v650 = vpop.permute.xlu0 %649
      %651 = vrot.lane.b32.xlu0 %v416, 32
      %v652 = vpop.permute.xlu0 %651
      %653 = vrot.lane.b32.xlu0 %v419, 32
      %v654 = vpop.permute.xlu0 %653
      %655 = vrot.lane.b32.xlu0 %v422, 32
      %v656 = vpop.permute.xlu0 %655
      %657 = vrot.lane.b32.xlu0 %v425, 32
      %v658 = vpop.permute.xlu0 %657
      %659 = vrot.lane.b32.xlu0 %v428, 32
      %v660 = vpop.permute.xlu0 %659
      %661 = vrot.lane.b32.xlu0 %v431, 32
      %v662 = vpop.permute.xlu0 %661
      %663 = vrot.lane.b32.xlu0 %v434, 32
      %v664 = vpop.permute.xlu0 %663
      %665 = vrot.lane.b32.xlu0 %v437, 32
      %v666 = vpop.permute.xlu0 %665
      %667 = vrot.lane.b32.xlu0 %v440, 32
      %v668 = vpop.permute.xlu0 %667
      %669 = vrot.lane.b32.xlu0 %v638, 32
      %v670 = vpop.permute.xlu0 %669
      %v687 = vrot.slane %v356, 2
      %v688 = vrot.slane %v357, 2
      %v689 = vsel %vm489, %v687, %v688
      %690 = vrot.lane.b32.xlu0 %v495, 40
      %v691 = vpop.permute.xlu0 %690
      %692 = vrot.lane.b32.xlu0 %v498, 40
      %v693 = vpop.permute.xlu0 %692
      %694 = vrot.lane.b32.xlu0 %v501, 40
      %v695 = vpop.permute.xlu0 %694
      %696 = vrot.lane.b32.xlu0 %v504, 40
      %v697 = vpop.permute.xlu0 %696
      %698 = vrot.lane.b32.xlu0 %v507, 40
      %v699 = vpop.permute.xlu0 %698
      %700 = vrot.lane.b32.xlu0 %v510, 40
      %v701 = vpop.permute.xlu0 %700
      %702 = vrot.lane.b32.xlu0 %v513, 40
      %v703 = vpop.permute.xlu0 %702
      %704 = vrot.lane.b32.xlu0 %v516, 40
      %v705 = vpop.permute.xlu0 %704
      %706 = vrot.lane.b32.xlu0 %v519, 40
      %v707 = vpop.permute.xlu0 %706
      %708 = vrot.lane.b32.xlu0 %v522, 40
      %v709 = vpop.permute.xlu0 %708
      %710 = vrot.lane.b32.xlu0 %v525, 40
      %v711 = vpop.permute.xlu0 %710
      %712 = vrot.lane.b32.xlu0 %v528, 40
      %v713 = vpop.permute.xlu0 %712
      %714 = vrot.lane.b32.xlu0 %v531, 40
      %v715 = vpop.permute.xlu0 %714
      %716 = vrot.lane.b32.xlu0 %v534, 40
      %v717 = vpop.permute.xlu0 %716
      %718 = vrot.lane.b32.xlu0 %v537, 40
      %v719 = vpop.permute.xlu0 %718
      %720 = vrot.lane.b32.xlu0 %v689, 40
      %v721 = vpop.permute.xlu0 %720
      %739 = vrot.lane.b32.xlu0 %v328, 48
      %v740 = vpop.permute.xlu0 %739
      %741 = vrot.lane.b32.xlu0 %v330, 48
      %v742 = vpop.permute.xlu0 %741
      %743 = vrot.lane.b32.xlu0 %v332, 48
      %v744 = vpop.permute.xlu0 %743
      %745 = vrot.lane.b32.xlu0 %v334, 48
      %v746 = vpop.permute.xlu0 %745
      %747 = vrot.lane.b32.xlu0 %v336, 48
      %v748 = vpop.permute.xlu0 %747
      %749 = vrot.lane.b32.xlu0 %v338, 48
      %v750 = vpop.permute.xlu0 %749
      %751 = vrot.lane.b32.xlu0 %v340, 48
      %v752 = vpop.permute.xlu0 %751
      %753 = vrot.lane.b32.xlu0 %v342, 48
      %v754 = vpop.permute.xlu0 %753
      %755 = vrot.lane.b32.xlu0 %v344, 48
      %v756 = vpop.permute.xlu0 %755
      %757 = vrot.lane.b32.xlu0 %v346, 48
      %v758 = vpop.permute.xlu0 %757
      %759 = vrot.lane.b32.xlu0 %v348, 48
      %v760 = vpop.permute.xlu0 %759
      %761 = vrot.lane.b32.xlu0 %v350, 48
      %v762 = vpop.permute.xlu0 %761
      %763 = vrot.lane.b32.xlu0 %v352, 48
      %v764 = vpop.permute.xlu0 %763
      %765 = vrot.lane.b32.xlu0 %v354, 48
      %v766 = vpop.permute.xlu0 %765
      %767 = vrot.lane.b32.xlu0 %v356, 48
      %v768 = vpop.permute.xlu0 %767
      %769 = vrot.lane.b32.xlu0 %v358, 48
      %v770 = vpop.permute.xlu0 %769
      %v788 = vrot.slane %v358, 1
      %v789 = vrot.slane %v359, 1
      %v790 = vsel %vm392, %v788, %v789
      %791 = vrot.lane.b32.xlu0 %v401, 56
      %v792 = vpop.permute.xlu0 %791
      %793 = vrot.lane.b32.xlu0 %v404, 56
      %v794 = vpop.permute.xlu0 %793
      %795 = vrot.lane.b32.xlu0 %v407, 56
      %v796 = vpop.permute.xlu0 %795
      %797 = vrot.lane.b32.xlu0 %v410, 56
      %v798 = vpop.permute.xlu0 %797
      %799 = vrot.lane.b32.xlu0 %v413, 56
      %v800 = vpop.permute.xlu0 %799
      %801 = vrot.lane.b32.xlu0 %v416, 56
      %v802 = vpop.permute.xlu0 %801
      %803 = vrot.lane.b32.xlu0 %v419, 56
      %v804 = vpop.permute.xlu0 %803
      %805 = vrot.lane.b32.xlu0 %v422, 56
      %v806 = vpop.permute.xlu0 %805
      %807 = vrot.lane.b32.xlu0 %v425, 56
      %v808 = vpop.permute.xlu0 %807
      %809 = vrot.lane.b32.xlu0 %v428, 56
      %v810 = vpop.permute.xlu0 %809
      %811 = vrot.lane.b32.xlu0 %v431, 56
      %v812 = vpop.permute.xlu0 %811
      %813 = vrot.lane.b32.xlu0 %v434, 56
      %v814 = vpop.permute.xlu0 %813
      %815 = vrot.lane.b32.xlu0 %v437, 56
      %v816 = vpop.permute.xlu0 %815
      %817 = vrot.lane.b32.xlu0 %v440, 56
      %v818 = vpop.permute.xlu0 %817
      %819 = vrot.lane.b32.xlu0 %v638, 56
      %v820 = vpop.permute.xlu0 %819
      %821 = vrot.lane.b32.xlu0 %v790, 56
      %v822 = vpop.permute.xlu0 %821
      %v839 = vrot.slane %v358, 2
      %v840 = vrot.slane %v359, 2
      %v841 = vsel %vm489, %v839, %v840
      %842 = vrot.lane.b32.xlu0 %v498, 64
      %v843 = vpop.permute.xlu0 %842
      %844 = vrot.lane.b32.xlu0 %v501, 64
      %v845 = vpop.permute.xlu0 %844
      %846 = vrot.lane.b32.xlu0 %v504, 64
      %v847 = vpop.permute.xlu0 %846
      %848 = vrot.lane.b32.xlu0 %v507, 64
      %v849 = vpop.permute.xlu0 %848
      %850 = vrot.lane.b32.xlu0 %v510, 64
      %v851 = vpop.permute.xlu0 %850
      %852 = vrot.lane.b32.xlu0 %v513, 64
      %v853 = vpop.permute.xlu0 %852
      %854 = vrot.lane.b32.xlu0 %v516, 64
      %v855 = vpop.permute.xlu0 %854
      %856 = vrot.lane.b32.xlu0 %v519, 64
      %v857 = vpop.permute.xlu0 %856
      %858 = vrot.lane.b32.xlu0 %v522, 64
      %v859 = vpop.permute.xlu0 %858
      %860 = vrot.lane.b32.xlu0 %v525, 64
      %v861 = vpop.permute.xlu0 %860
      %862 = vrot.lane.b32.xlu0 %v528, 64
      %v863 = vpop.permute.xlu0 %862
      %864 = vrot.lane.b32.xlu0 %v531, 64
      %v865 = vpop.permute.xlu0 %864
      %866 = vrot.lane.b32.xlu0 %v534, 64
      %v867 = vpop.permute.xlu0 %866
      %868 = vrot.lane.b32.xlu0 %v537, 64
      %v869 = vpop.permute.xlu0 %868
      %870 = vrot.lane.b32.xlu0 %v689, 64
      %v871 = vpop.permute.xlu0 %870
      %872 = vrot.lane.b32.xlu0 %v841, 64
      %v873 = vpop.permute.xlu0 %872
      %v890 = vsel %vm269, %v324, %v442
      %v891 = vsel %vm269, %v326, %v444
      %v892 = vsel %vm269, %v328, %v446
      %v893 = vsel %vm269, %v330, %v448
      %v894 = vsel %vm269, %v332, %v450
      %v895 = vsel %vm269, %v334, %v452
      %v896 = vsel %vm269, %v336, %v454
      %v897 = vsel %vm269, %v338, %v456
      %v898 = vsel %vm269, %v340, %v458
      %v899 = vsel %vm269, %v342, %v460
      %v900 = vsel %vm269, %v344, %v462
      %v901 = vsel %vm269, %v346, %v464
      %v902 = vsel %vm269, %v348, %v466
      %v903 = vsel %vm269, %v350, %v468
      %v904 = vsel %vm269, %v352, %v470
      %v905 = vsel %vm269, %v354, %v472
      %vm906 = vcmask 130048
      %v907 = vsel %vm906, %v890, %v539
      %v908 = vsel %vm906, %v891, %v541
      %v909 = vsel %vm906, %v892, %v543
      %v910 = vsel %vm906, %v893, %v545
      %v911 = vsel %vm906, %v894, %v547
      %v912 = vsel %vm906, %v895, %v549
      %v913 = vsel %vm906, %v896, %v551
      %v914 = vsel %vm906, %v897, %v553
      %v915 = vsel %vm906, %v898, %v555
      %v916 = vsel %vm906, %v899, %v557
      %v917 = vsel %vm906, %v900, %v559
      %v918 = vsel %vm906, %v901, %v561
      %v919 = vsel %vm906, %v902, %v563
      %v920 = vsel %vm906, %v903, %v565
      %v921 = vsel %vm906, %v904, %v567
      %v922 = vsel %vm906, %v905, %v569
      %vm923 = vcmask 195584
      %v924 = vsel %vm923, %v907, %v588
      %v925 = vsel %vm923, %v908, %v590
      %v926 = vsel %vm923, %v909, %v592
      %v927 = vsel %vm923, %v910, %v594
      %v928 = vsel %vm923, %v911, %v596
      %v929 = vsel %vm923, %v912, %v598
      %v930 = vsel %vm923, %v913, %v600
      %v931 = vsel %vm923, %v914, %v602
      %v932 = vsel %vm923, %v915, %v604
      %v933 = vsel %vm923, %v916, %v606
      %v934 = vsel %vm923, %v917, %v608
      %v935 = vsel %vm923, %v918, %v610
      %v936 = vsel %vm923, %v919, %v612
      %v937 = vsel %vm923, %v920, %v614
      %v938 = vsel %vm923, %v921, %v616
      %v939 = vsel %vm923, %v922, %v618
      %vm940 = vcmask 261120
      %v941 = vsel %vm940, %v924, %v640
      %v942 = vsel %vm940, %v925, %v642
      %v943 = vsel %vm940, %v926, %v644
      %v944 = vsel %vm940, %v927, %v646
      %v945 = vsel %vm940, %v928, %v648
      %v946 = vsel %vm940, %v929, %v650
      %v947 = vsel %vm940, %v930, %v652
      %v948 = vsel %vm940, %v931, %v654
      %v949 = vsel %vm940, %v932, %v656
      %v950 = vsel %vm940, %v933, %v658
      %v951 = vsel %vm940, %v934, %v660
      %v952 = vsel %vm940, %v935, %v662
      %v953 = vsel %vm940, %v936, %v664
      %v954 = vsel %vm940, %v937, %v666
      %v955 = vsel %vm940, %v938, %v668
      %v956 = vsel %vm940, %v939, %v670
      %vm957 = vcmask 326656
      %v958 = vsel %vm957, %v941, %v691
      %v959 = vsel %vm957, %v942, %v693
      %v960 = vsel %vm957, %v943, %v695
      %v961 = vsel %vm957, %v944, %v697
      %v962 = vsel %vm957, %v945, %v699
      %v963 = vsel %vm957, %v946, %v701
      %v964 = vsel %vm957, %v947, %v703
      %v965 = vsel %vm957, %v948, %v705
      %v966 = vsel %vm957, %v949, %v707
      %v967 = vsel %vm957, %v950, %v709
      %v968 = vsel %vm957, %v951, %v711
      %v969 = vsel %vm957, %v952, %v713
      %v970 = vsel %vm957, %v953, %v715
      %v971 = vsel %vm957, %v954, %v717
      %v972 = vsel %vm957, %v955, %v719
      %v973 = vsel %vm957, %v956, %v721
      %vm974 = vcmask 392192
      %v975 = vsel %vm974, %v958, %v740
      %v976 = vsel %vm974, %v959, %v742
      %v977 = vsel %vm974, %v960, %v744
      %v978 = vsel %vm974, %v961, %v746
      %v979 = vsel %vm974, %v962, %v748
      %v980 = vsel %vm974, %v963, %v750
      %v981 = vsel %vm974, %v964, %v752
      %v982 = vsel %vm974, %v965, %v754
      %v983 = vsel %vm974, %v966, %v756
      %v984 = vsel %vm974, %v967, %v758
      %v985 = vsel %vm974, %v968, %v760
      %v986 = vsel %vm974, %v969, %v762
      %v987 = vsel %vm974, %v970, %v764
      %v988 = vsel %vm974, %v971, %v766
      %v989 = vsel %vm974, %v972, %v768
      %v990 = vsel %vm974, %v973, %v770
      %vm991 = vcmask 457728
      %v992 = vsel %vm991, %v975, %v792
      %v993 = vsel %vm991, %v976, %v794
      %v994 = vsel %vm991, %v977, %v796
      %v995 = vsel %vm991, %v978, %v798
      %v996 = vsel %vm991, %v979, %v800
      %v997 = vsel %vm991, %v980, %v802
      %v998 = vsel %vm991, %v981, %v804
      %v999 = vsel %vm991, %v982, %v806
      %v1000 = vsel %vm991, %v983, %v808
      %v1001 = vsel %vm991, %v984, %v810
      %v1002 = vsel %vm991, %v985, %v812
      %v1003 = vsel %vm991, %v986, %v814
      %v1004 = vsel %vm991, %v987, %v816
      %v1005 = vsel %vm991, %v988, %v818
      %v1006 = vsel %vm991, %v989, %v820
      %v1007 = vsel %vm991, %v990, %v822
      %vm1008 = vcmask 523264
      %v1009 = vsel %vm1008, %v992, %v843
      %v1010 = vsel %vm1008, %v993, %v845
      %v1011 = vsel %vm1008, %v994, %v847
      %v1012 = vsel %vm1008, %v995, %v849
      %v1013 = vsel %vm1008, %v996, %v851
      %v1014 = vsel %vm1008, %v997, %v853
      %v1015 = vsel %vm1008, %v998, %v855
      %v1016 = vsel %vm1008, %v999, %v857
      %v1017 = vsel %vm1008, %v1000, %v859
      %v1018 = vsel %vm1008, %v1001, %v861
      %v1019 = vsel %vm1008, %v1002, %v863
      %v1020 = vsel %vm1008, %v1003, %v865
      %v1021 = vsel %vm1008, %v1004, %v867
      %v1022 = vsel %vm1008, %v1005, %v869
      %v1023 = vsel %vm1008, %v1006, %v871
      %v1024 = vsel %vm1008, %v1007, %v873
      %v1025 = vpack.c.bf16 %v1010, %v1009
      %v1026 = vpack.c.bf16 %v1012, %v1011
      %v1027 = vpack.c.bf16 %v1014, %v1013
      %v1028 = vpack.c.bf16 %v1016, %v1015
      %v1029 = vpack.c.bf16 %v1018, %v1017
      %v1030 = vpack.c.bf16 %v1020, %v1019
      %v1031 = vpack.c.bf16 %v1022, %v1021
      %v1032 = vpack.c.bf16 %v1024, %v1023
      %v1033 = vld [vmem:[%s1] sm:$0xf]
      %v1034 = vld [vmem:[%s1 + $0x4] sm:$0xf]
      %v1035 = vld [vmem:[%s1 + $0x8] sm:$0xf]
      %v1036 = vld [vmem:[%s1 + $0xc] sm:$0xf]
      %v1037 = vld [vmem:[%s1 + $0x10] sm:$0xf]
      %v1038 = vld [vmem:[%s1 + $0x14] sm:$0xf]
      %v1039 = vld [vmem:[%s1 + $0x18] sm:$0xf]
      %v1040 = vld [vmem:[%s1 + $0x1c] sm:$0xf]
      %v1041 = vld [vmem:[%s1 + $0x20] sm:$0xf]
      %v1042 = vld [vmem:[%s2] sm:$0x1]
      %v1044 = vperm.slane %v1042, 0
      %v1055 = vunpack.c.l.b16 %v1033
      %v1056 = vunpack.c.l.b16 %v1034
      %v1057 = vunpack.c.l.b16 %v1035
      %v1058 = vunpack.c.l.b16 %v1036
      %v1059 = vunpack.c.l.b16 %v1037
      %v1060 = vunpack.c.l.b16 %v1038
      %v1061 = vunpack.c.l.b16 %v1039
      %v1062 = vunpack.c.l.b16 %v1040
      %v1063 = vunpack.c.l.b16 %v1041
      %v1064 = vpack.c.b16 %v1056, %v1055
      %v1065 = vpack.c.b16 %v1058, %v1057
      %v1066 = vpack.c.b16 %v1060, %v1059
      %v1067 = vpack.c.b16 %v1062, %v1061
      %v1068 = vpack.c.b16 %v1063, %v1063
      %vm1073 = vcmask 588800
      %v1075 = vsel %vm1073, %v1025, 0
      %v1078 = vsel %vm1073, %v1026, 0
      %v1081 = vsel %vm1073, %v1027, 0
      %v1084 = vsel %vm1073, %v1028, 0
      %v1087 = vsel %vm1073, %v1029, 0
      %v1090 = vsel %vm1073, %v1030, 0
      %v1093 = vsel %vm1073, %v1031, 0
      %v1096 = vsel %vm1073, %v1032, 0
      %vm1098 = vcmask 1043456
      %v1100 = vsel %vm1098, %v1068, 0
      %1102 = vmatpush.bf16.msra.mxu0 0
      %1103 = vmatpush.bf16.msra.mxu0 0
      %1104 = vmatpush.bf16.msra.mxu0 0
      %1105 = vmatpush.bf16.msra.mxu0 %v1100
      %1106 = vmatpush.bf16.msra.mxu0 %v1067
      %1107 = vmatpush.bf16.msra.mxu0 %v1066
      %1108 = vmatpush.bf16.msra.mxu0 %v1065
      %1109 = vmatpush.bf16.msra.mxu0 %v1064
      %1110 = vmatmul.bf16.gmra.mxu0 %v1075
      %v1111 = vpop.f32.mrf.mxu0
      %v1112 = vadd.f32 %v1044, %v1111
      %v1113 = vpop.f32.mrf.mxu0
      %v1114 = vadd.f32 %v1044, %v1113
      %1115 = vmatmul.bf16.gmra.mxu0 %v1078
      %v1116 = vpop.f32.mrf.mxu0
      %v1117 = vadd.f32 %v1044, %v1116
      %v1118 = vpop.f32.mrf.mxu0
      %v1119 = vadd.f32 %v1044, %v1118
      %1120 = vmatmul.bf16.gmra.mxu0 %v1081
      %v1121 = vpop.f32.mrf.mxu0
      %v1122 = vadd.f32 %v1044, %v1121
      %v1123 = vpop.f32.mrf.mxu0
      %v1124 = vadd.f32 %v1044, %v1123
      %1125 = vmatmul.bf16.gmra.mxu0 %v1084
      %v1126 = vpop.f32.mrf.mxu0
      %v1127 = vadd.f32 %v1044, %v1126
      %v1128 = vpop.f32.mrf.mxu0
      %v1129 = vadd.f32 %v1044, %v1128
      %1130 = vmatmul.bf16.gmra.mxu0 %v1087
      %v1131 = vpop.f32.mrf.mxu0
      %v1132 = vadd.f32 %v1044, %v1131
      %v1133 = vpop.f32.mrf.mxu0
      %v1134 = vadd.f32 %v1044, %v1133
      %1135 = vmatmul.bf16.gmra.mxu0 %v1090
      %v1136 = vpop.f32.mrf.mxu0
      %v1137 = vadd.f32 %v1044, %v1136
      %v1138 = vpop.f32.mrf.mxu0
      %v1139 = vadd.f32 %v1044, %v1138
      %1140 = vmatmul.bf16.gmra.mxu0 %v1093
      %v1141 = vpop.f32.mrf.mxu0
      %v1142 = vadd.f32 %v1044, %v1141
      %v1143 = vpop.f32.mrf.mxu0
      %v1144 = vadd.f32 %v1044, %v1143
      %1145 = vmatmul.bf16.gmra.mxu0 %v1096
      %v1146 = vpop.f32.mrf.mxu0
      %v1147 = vadd.f32 %v1044, %v1146
      %v1148 = vpop.f32.mrf.mxu0
      %v1149 = vadd.f32 %v1044, %v1148
      %1150 = vdwg.mxu0
      %vm1151 = vcmp.ge.f32.partialorder %v1112, 0.0
      %vm1152 = vcmp.ge.f32.partialorder %v1114, 0.0
      %vm1153 = vcmp.ge.f32.partialorder %v1117, 0.0
      %vm1154 = vcmp.ge.f32.partialorder %v1119, 0.0
      %vm1155 = vcmp.ge.f32.partialorder %v1122, 0.0
      %vm1156 = vcmp.ge.f32.partialorder %v1124, 0.0
      %vm1157 = vcmp.ge.f32.partialorder %v1127, 0.0
      %vm1158 = vcmp.ge.f32.partialorder %v1129, 0.0
      %vm1159 = vcmp.ge.f32.partialorder %v1132, 0.0
      %vm1160 = vcmp.ge.f32.partialorder %v1134, 0.0
      %vm1161 = vcmp.ge.f32.partialorder %v1137, 0.0
      %vm1162 = vcmp.ge.f32.partialorder %v1139, 0.0
      %vm1163 = vcmp.ge.f32.partialorder %v1142, 0.0
      %vm1164 = vcmp.ge.f32.partialorder %v1144, 0.0
      %vm1165 = vcmp.ge.f32.partialorder %v1147, 0.0
      %vm1166 = vcmp.ge.f32.partialorder %v1149, 0.0
      %v1167 = vmul.f32 %v1112, 0.2
      %v1168 = vmul.f32 %v1114, 0.2
      %v1169 = vmul.f32 %v1117, 0.2
      %v1170 = vmul.f32 %v1119, 0.2
      %v1171 = vmul.f32 %v1122, 0.2
      %v1172 = vmul.f32 %v1124, 0.2
      %v1173 = vmul.f32 %v1127, 0.2
      %v1174 = vmul.f32 %v1129, 0.2
      %v1175 = vmul.f32 %v1132, 0.2
      %v1176 = vmul.f32 %v1134, 0.2
      %v1177 = vmul.f32 %v1137, 0.2
      %v1178 = vmul.f32 %v1139, 0.2
      %v1179 = vmul.f32 %v1142, 0.2
      %v1180 = vmul.f32 %v1144, 0.2
      %v1181 = vmul.f32 %v1147, 0.2
      %v1182 = vmul.f32 %v1149, 0.2
      %v1183 = vsel %vm1151, %v1112, %v1167
      %v1184 = vsel %vm1152, %v1114, %v1168
      %v1185 = vsel %vm1153, %v1117, %v1169
      %v1186 = vsel %vm1154, %v1119, %v1170
      %v1187 = vsel %vm1155, %v1122, %v1171
      %v1188 = vsel %vm1156, %v1124, %v1172
      %v1189 = vsel %vm1157, %v1127, %v1173
      %v1190 = vsel %vm1158, %v1129, %v1174
      %v1191 = vsel %vm1159, %v1132, %v1175
      %v1192 = vsel %vm1160, %v1134, %v1176
      %v1193 = vsel %vm1161, %v1137, %v1177
      %v1194 = vsel %vm1162, %v1139, %v1178
      %v1195 = vsel %vm1163, %v1142, %v1179
      %v1196 = vsel %vm1164, %v1144, %v1180
      %v1197 = vsel %vm1165, %v1147, %v1181
      %v1198 = vsel %vm1166, %v1149, %v1182
      %1215 = vrot.lane.b32.xlu0 %v1183, 124
      %v1216 = vpop.permute.xlu0 %1215
      %1217 = vrot.lane.b32.xlu0 %v1184, 124
      %v1218 = vpop.permute.xlu0 %1217
      %1219 = vrot.lane.b32.xlu0 %v1185, 124
      %v1220 = vpop.permute.xlu0 %1219
      %1221 = vrot.lane.b32.xlu0 %v1186, 124
      %v1222 = vpop.permute.xlu0 %1221
      %1223 = vrot.lane.b32.xlu0 %v1187, 124
      %v1224 = vpop.permute.xlu0 %1223
      %1225 = vrot.lane.b32.xlu0 %v1188, 124
      %v1226 = vpop.permute.xlu0 %1225
      %1227 = vrot.lane.b32.xlu0 %v1189, 124
      %v1228 = vpop.permute.xlu0 %1227
      %1229 = vrot.lane.b32.xlu0 %v1190, 124
      %v1230 = vpop.permute.xlu0 %1229
      %1231 = vrot.lane.b32.xlu0 %v1191, 124
      %v1232 = vpop.permute.xlu0 %1231
      %1233 = vrot.lane.b32.xlu0 %v1192, 124
      %v1234 = vpop.permute.xlu0 %1233
      %1235 = vrot.lane.b32.xlu0 %v1193, 124
      %v1236 = vpop.permute.xlu0 %1235
      %1237 = vrot.lane.b32.xlu0 %v1194, 124
      %v1238 = vpop.permute.xlu0 %1237
      %1239 = vrot.lane.b32.xlu0 %v1195, 124
      %v1240 = vpop.permute.xlu0 %1239
      %1241 = vrot.lane.b32.xlu0 %v1196, 124
      %v1242 = vpop.permute.xlu0 %1241
      %1243 = vrot.lane.b32.xlu0 %v1197, 124
      %v1244 = vpop.permute.xlu0 %1243
      %1245 = vrot.lane.b32.xlu0 %v1198, 124
      %v1246 = vpop.permute.xlu0 %1245
      %v1263 = vadd.f32 %v1183, %v1216
      %v1264 = vadd.f32 %v1184, %v1218
      %v1265 = vadd.f32 %v1185, %v1220
      %v1266 = vadd.f32 %v1186, %v1222
      %v1267 = vadd.f32 %v1187, %v1224
      %v1268 = vadd.f32 %v1188, %v1226
      %v1269 = vadd.f32 %v1189, %v1228
      %v1270 = vadd.f32 %v1190, %v1230
      %v1271 = vadd.f32 %v1191, %v1232
      %v1272 = vadd.f32 %v1192, %v1234
      %v1273 = vadd.f32 %v1193, %v1236
      %v1274 = vadd.f32 %v1194, %v1238
      %v1275 = vadd.f32 %v1195, %v1240
      %v1276 = vadd.f32 %v1196, %v1242
      %v1277 = vadd.f32 %v1197, %v1244
      %v1278 = vadd.f32 %v1198, %v1246
      %v1279 = vadd.f32 %v1263, %v1264
      %v1280 = vadd.f32 %v1265, %v1266
      %v1281 = vadd.f32 %v1267, %v1268
      %v1282 = vadd.f32 %v1269, %v1270
      %v1283 = vadd.f32 %v1271, %v1272
      %v1284 = vadd.f32 %v1273, %v1274
      %v1285 = vadd.f32 %v1275, %v1276
      %v1286 = vadd.f32 %v1277, %v1278
      %v1287 = vmul.f32 %v1279, 0.25
      %v1288 = vmul.f32 %v1280, 0.25
      %v1289 = vmul.f32 %v1281, 0.25
      %v1290 = vmul.f32 %v1282, 0.25
      %v1291 = vmul.f32 %v1283, 0.25
      %v1292 = vmul.f32 %v1284, 0.25
      %v1293 = vmul.f32 %v1285, 0.25
      %v1294 = vmul.f32 %v1286, 0.25
      %1311 = vrot.lane.b32.xlu0 %v253, 124
      %v1312 = vpop.permute.xlu0 %1311
      %1313 = vrot.lane.b32.xlu0 %v254, 124
      %v1314 = vpop.permute.xlu0 %1313
      %1315 = vrot.lane.b32.xlu0 %v255, 124
      %v1316 = vpop.permute.xlu0 %1315
      %1317 = vrot.lane.b32.xlu0 %v256, 124
      %v1318 = vpop.permute.xlu0 %1317
      %1319 = vrot.lane.b32.xlu0 %v257, 124
      %v1320 = vpop.permute.xlu0 %1319
      %1321 = vrot.lane.b32.xlu0 %v258, 124
      %v1322 = vpop.permute.xlu0 %1321
      %1323 = vrot.lane.b32.xlu0 %v259, 124
      %v1324 = vpop.permute.xlu0 %1323
      %1325 = vrot.lane.b32.xlu0 %v260, 124
      %v1326 = vpop.permute.xlu0 %1325
      %1327 = vrot.lane.b32.xlu0 %v261, 124
      %v1328 = vpop.permute.xlu0 %1327
      %1329 = vrot.lane.b32.xlu0 %v262, 124
      %v1330 = vpop.permute.xlu0 %1329
      %1331 = vrot.lane.b32.xlu0 %v263, 124
      %v1332 = vpop.permute.xlu0 %1331
      %1333 = vrot.lane.b32.xlu0 %v264, 124
      %v1334 = vpop.permute.xlu0 %1333
      %1335 = vrot.lane.b32.xlu0 %v265, 124
      %v1336 = vpop.permute.xlu0 %1335
      %1337 = vrot.lane.b32.xlu0 %v266, 124
      %v1338 = vpop.permute.xlu0 %1337
      %1339 = vrot.lane.b32.xlu0 %v267, 124
      %v1340 = vpop.permute.xlu0 %1339
      %1341 = vrot.lane.b32.xlu0 %v268, 124
      %v1342 = vpop.permute.xlu0 %1341
      %v1359 = vadd.f32 %v253, %v1312
      %v1360 = vadd.f32 %v254, %v1314
      %v1361 = vadd.f32 %v255, %v1316
      %v1362 = vadd.f32 %v256, %v1318
      %v1363 = vadd.f32 %v257, %v1320
      %v1364 = vadd.f32 %v258, %v1322
      %v1365 = vadd.f32 %v259, %v1324
      %v1366 = vadd.f32 %v260, %v1326
      %v1367 = vadd.f32 %v261, %v1328
      %v1368 = vadd.f32 %v262, %v1330
      %v1369 = vadd.f32 %v263, %v1332
      %v1370 = vadd.f32 %v264, %v1334
      %v1371 = vadd.f32 %v265, %v1336
      %v1372 = vadd.f32 %v266, %v1338
      %v1373 = vadd.f32 %v267, %v1340
      %v1374 = vadd.f32 %v268, %v1342
      %v1375 = vadd.f32 %v1359, %v1360
      %v1376 = vadd.f32 %v1361, %v1362
      %v1377 = vadd.f32 %v1363, %v1364
      %v1378 = vadd.f32 %v1365, %v1366
      %v1379 = vadd.f32 %v1367, %v1368
      %v1380 = vadd.f32 %v1369, %v1370
      %v1381 = vadd.f32 %v1371, %v1372
      %v1382 = vadd.f32 %v1373, %v1374
      %v1383 = vmul.f32 %v1375, 0.25
      %v1384 = vmul.f32 %v1376, 0.25
      %v1385 = vmul.f32 %v1377, 0.25
      %v1386 = vmul.f32 %v1378, 0.25
      %v1387 = vmul.f32 %v1379, 0.25
      %v1388 = vmul.f32 %v1380, 0.25
      %v1389 = vmul.f32 %v1381, 0.25
      %v1390 = vmul.f32 %v1382, 0.25
      %vm1391 = vcmask 31744
      %1392 = vst.msk [vmem:[#allocation3] sm:$0xff] %vm1391, 0.0
      %vm1393 = vcmask 25600
      %1394 = vst.msk [vmem:[#allocation3 + $0x8] sm:$0x3] %vm1393, 0.0
      %1395 = vst.msk [vmem:[#allocation3 + $0x10] sm:$0xff] %vm1391, 0.0
      %1396 = vst.msk [vmem:[#allocation3 + $0x18] sm:$0x3] %vm1393, 0.0
      %1397 = vst.msk [vmem:[#allocation3 + $0x20] sm:$0xff] %vm1391, 0.0
      %1398 = vst.msk [vmem:[#allocation3 + $0x28] sm:$0x3] %vm1393, 0.0
      %1399 = vst.msk [vmem:[#allocation3 + $0x30] sm:$0xff] %vm1391, 0.0
      %1400 = vst.msk [vmem:[#allocation3 + $0x38] sm:$0x3] %vm1393, 0.0
      %1401 = vst.msk [vmem:[#allocation3 + $0x40] sm:$0xff] %vm1391, 0.0
      %1402 = vst.msk [vmem:[#allocation3 + $0x48] sm:$0x3] %vm1393, 0.0
      %1403 = vst.msk [vmem:[#allocation3 + $0x50] sm:$0xff] %vm1391, 0.0
      %1404 = vst.msk [vmem:[#allocation3 + $0x58] sm:$0x3] %vm1393, 0.0
      %1405 = vst.msk [vmem:[#allocation3 + $0x60] sm:$0xff] %vm1391, 0.0
      %1406 = vst.msk [vmem:[#allocation3 + $0x68] sm:$0x3] %vm1393, 0.0
      %1407 = vst.msk [vmem:[#allocation3 + $0x70] sm:$0xff] %vm1391, 0.0
      %1408 = vst.msk [vmem:[#allocation3 + $0x78] sm:$0x3] %vm1393, 0.0
      %1409 = vst.msk [vmem:[#allocation3 + $0x80] sm:$0xff] %vm1391, 0.0
      %1410 = vst.msk [vmem:[#allocation3 + $0x88] sm:$0x3] %vm1393, 0.0
      %1411 = vst.msk [vmem:[#allocation3 + $0x90] sm:$0xff] %vm1391, 0.0
      %1412 = vst.msk [vmem:[#allocation3 + $0x98] sm:$0x3] %vm1393, 0.0
      %s1413 = scalar_lea.vmem [#allocation3], 16
      %1414 = vst.msk [vmem:[%s1413 + $0x1] sm:$0xff] %vm1391, %v1287
      %1415 = vst.msk [vmem:[%s1413 + $0x11] sm:$0xff] %vm1391, %v1288
      %1416 = vst.msk [vmem:[%s1413 + $0x21] sm:$0xff] %vm1391, %v1289
      %1417 = vst.msk [vmem:[%s1413 + $0x31] sm:$0xff] %vm1391, %v1290
      %1418 = vst.msk [vmem:[%s1413 + $0x41] sm:$0xff] %vm1391, %v1291
      %1419 = vst.msk [vmem:[%s1413 + $0x51] sm:$0xff] %vm1391, %v1292
      %1420 = vst.msk [vmem:[%s1413 + $0x61] sm:$0xff] %vm1391, %v1293
      %1421 = vst.msk [vmem:[%s1413 + $0x71] sm:$0xff] %vm1391, %v1294
      %v1422 = vld [vmem:[#allocation3] sm:$0xff]
      %v1423 = vld [vmem:[#allocation3 + $0x8] sm:$0x3]
      %v1424 = vld [vmem:[#allocation3 + $0x10] sm:$0xff]
      %v1425 = vld [vmem:[#allocation3 + $0x18] sm:$0x3]
      %v1426 = vld [vmem:[#allocation3 + $0x20] sm:$0xff]
      %v1427 = vld [vmem:[#allocation3 + $0x28] sm:$0x3]
      %v1428 = vld [vmem:[#allocation3 + $0x30] sm:$0xff]
      %v1429 = vld [vmem:[#allocation3 + $0x38] sm:$0x3]
      %v1430 = vld [vmem:[#allocation3 + $0x40] sm:$0xff]
      %v1431 = vld [vmem:[#allocation3 + $0x48] sm:$0x3]
      %v1432 = vld [vmem:[#allocation3 + $0x50] sm:$0xff]
      %v1433 = vld [vmem:[#allocation3 + $0x58] sm:$0x3]
      %v1434 = vld [vmem:[#allocation3 + $0x60] sm:$0xff]
      %v1435 = vld [vmem:[#allocation3 + $0x68] sm:$0x3]
      %v1436 = vld [vmem:[#allocation3 + $0x70] sm:$0xff]
      %v1437 = vld [vmem:[#allocation3 + $0x78] sm:$0x3]
      %v1438 = vld [vmem:[#allocation3 + $0x80] sm:$0xff]
      %v1439 = vld [vmem:[#allocation3 + $0x88] sm:$0x3]
      %v1440 = vld [vmem:[#allocation3 + $0x90] sm:$0xff]
      %v1441 = vld [vmem:[#allocation3 + $0x98] sm:$0x3]
      %v1458 = vrot.slane %v1422, 1
      %v1459 = vrot.slane %v1423, 1
      %v1460 = vsel %vm392, %v1458, %v1459
      %v1461 = vrot.slane %v1424, 1
      %v1462 = vrot.slane %v1425, 1
      %v1463 = vsel %vm392, %v1461, %v1462
      %v1464 = vrot.slane %v1426, 1
      %v1465 = vrot.slane %v1427, 1
      %v1466 = vsel %vm392, %v1464, %v1465
      %v1467 = vrot.slane %v1428, 1
      %v1468 = vrot.slane %v1429, 1
      %v1469 = vsel %vm392, %v1467, %v1468
      %v1470 = vrot.slane %v1430, 1
      %v1471 = vrot.slane %v1431, 1
      %v1472 = vsel %vm392, %v1470, %v1471
      %v1473 = vrot.slane %v1432, 1
      %v1474 = vrot.slane %v1433, 1
      %v1475 = vsel %vm392, %v1473, %v1474
      %v1476 = vrot.slane %v1434, 1
      %v1477 = vrot.slane %v1435, 1
      %v1478 = vsel %vm392, %v1476, %v1477
      %v1479 = vrot.slane %v1436, 1
      %v1480 = vrot.slane %v1437, 1
      %v1481 = vsel %vm392, %v1479, %v1480
      %1482 = vrot.lane.b32.xlu0 %v1460, 4
      %v1483 = vpop.permute.xlu0 %1482
      %1484 = vrot.lane.b32.xlu0 %v1463, 4
      %v1485 = vpop.permute.xlu0 %1484
      %1486 = vrot.lane.b32.xlu0 %v1466, 4
      %v1487 = vpop.permute.xlu0 %1486
      %1488 = vrot.lane.b32.xlu0 %v1469, 4
      %v1489 = vpop.permute.xlu0 %1488
      %1490 = vrot.lane.b32.xlu0 %v1472, 4
      %v1491 = vpop.permute.xlu0 %1490
      %1492 = vrot.lane.b32.xlu0 %v1475, 4
      %v1493 = vpop.permute.xlu0 %1492
      %1494 = vrot.lane.b32.xlu0 %v1478, 4
      %v1495 = vpop.permute.xlu0 %1494
      %1496 = vrot.lane.b32.xlu0 %v1481, 4
      %v1497 = vpop.permute.xlu0 %1496
      %v1506 = vrot.slane %v1422, 2
      %v1507 = vrot.slane %v1423, 2
      %v1508 = vsel %vm489, %v1506, %v1507
      %v1509 = vrot.slane %v1424, 2
      %v1510 = vrot.slane %v1425, 2
      %v1511 = vsel %vm489, %v1509, %v1510
      %v1512 = vrot.slane %v1426, 2
      %v1513 = vrot.slane %v1427, 2
      %v1514 = vsel %vm489, %v1512, %v1513
      %v1515 = vrot.slane %v1428, 2
      %v1516 = vrot.slane %v1429, 2
      %v1517 = vsel %vm489, %v1515, %v1516
      %v1518 = vrot.slane %v1430, 2
      %v1519 = vrot.slane %v1431, 2
      %v1520 = vsel %vm489, %v1518, %v1519
      %v1521 = vrot.slane %v1432, 2
      %v1522 = vrot.slane %v1433, 2
      %v1523 = vsel %vm489, %v1521, %v1522
      %v1524 = vrot.slane %v1434, 2
      %v1525 = vrot.slane %v1435, 2
      %v1526 = vsel %vm489, %v1524, %v1525
      %v1527 = vrot.slane %v1436, 2
      %v1528 = vrot.slane %v1437, 2
      %v1529 = vsel %vm489, %v1527, %v1528
      %1530 = vrot.lane.b32.xlu0 %v1508, 8
      %v1531 = vpop.permute.xlu0 %1530
      %1532 = vrot.lane.b32.xlu0 %v1511, 8
      %v1533 = vpop.permute.xlu0 %1532
      %1534 = vrot.lane.b32.xlu0 %v1514, 8
      %v1535 = vpop.permute.xlu0 %1534
      %1536 = vrot.lane.b32.xlu0 %v1517, 8
      %v1537 = vpop.permute.xlu0 %1536
      %1538 = vrot.lane.b32.xlu0 %v1520, 8
      %v1539 = vpop.permute.xlu0 %1538
      %1540 = vrot.lane.b32.xlu0 %v1523, 8
      %v1541 = vpop.permute.xlu0 %1540
      %1542 = vrot.lane.b32.xlu0 %v1526, 8
      %v1543 = vpop.permute.xlu0 %1542
      %1544 = vrot.lane.b32.xlu0 %v1529, 8
      %v1545 = vpop.permute.xlu0 %1544
      %1555 = vrot.lane.b32.xlu0 %v1424, 12
      %v1556 = vpop.permute.xlu0 %1555
      %1557 = vrot.lane.b32.xlu0 %v1426, 12
      %v1558 = vpop.permute.xlu0 %1557
      %1559 = vrot.lane.b32.xlu0 %v1428, 12
      %v1560 = vpop.permute.xlu0 %1559
      %1561 = vrot.lane.b32.xlu0 %v1430, 12
      %v1562 = vpop.permute.xlu0 %1561
      %1563 = vrot.lane.b32.xlu0 %v1432, 12
      %v1564 = vpop.permute.xlu0 %1563
      %1565 = vrot.lane.b32.xlu0 %v1434, 12
      %v1566 = vpop.permute.xlu0 %1565
      %1567 = vrot.lane.b32.xlu0 %v1436, 12
      %v1568 = vpop.permute.xlu0 %1567
      %1569 = vrot.lane.b32.xlu0 %v1438, 12
      %v1570 = vpop.permute.xlu0 %1569
      %v1580 = vrot.slane %v1438, 1
      %v1581 = vrot.slane %v1439, 1
      %v1582 = vsel %vm392, %v1580, %v1581
      %1583 = vrot.lane.b32.xlu0 %v1463, 16
      %v1584 = vpop.permute.xlu0 %1583
      %1585 = vrot.lane.b32.xlu0 %v1466, 16
      %v1586 = vpop.permute.xlu0 %1585
      %1587 = vrot.lane.b32.xlu0 %v1469, 16
      %v1588 = vpop.permute.xlu0 %1587
      %1589 = vrot.lane.b32.xlu0 %v1472, 16
      %v1590 = vpop.permute.xlu0 %1589
      %1591 = vrot.lane.b32.xlu0 %v1475, 16
      %v1592 = vpop.permute.xlu0 %1591
      %1593 = vrot.lane.b32.xlu0 %v1478, 16
      %v1594 = vpop.permute.xlu0 %1593
      %1595 = vrot.lane.b32.xlu0 %v1481, 16
      %v1596 = vpop.permute.xlu0 %1595
      %1597 = vrot.lane.b32.xlu0 %v1582, 16
      %v1598 = vpop.permute.xlu0 %1597
      %v1607 = vrot.slane %v1438, 2
      %v1608 = vrot.slane %v1439, 2
      %v1609 = vsel %vm489, %v1607, %v1608
      %1610 = vrot.lane.b32.xlu0 %v1511, 20
      %v1611 = vpop.permute.xlu0 %1610
      %1612 = vrot.lane.b32.xlu0 %v1514, 20
      %v1613 = vpop.permute.xlu0 %1612
      %1614 = vrot.lane.b32.xlu0 %v1517, 20
      %v1615 = vpop.permute.xlu0 %1614
      %1616 = vrot.lane.b32.xlu0 %v1520, 20
      %v1617 = vpop.permute.xlu0 %1616
      %1618 = vrot.lane.b32.xlu0 %v1523, 20
      %v1619 = vpop.permute.xlu0 %1618
      %1620 = vrot.lane.b32.xlu0 %v1526, 20
      %v1621 = vpop.permute.xlu0 %1620
      %1622 = vrot.lane.b32.xlu0 %v1529, 20
      %v1623 = vpop.permute.xlu0 %1622
      %1624 = vrot.lane.b32.xlu0 %v1609, 20
      %v1625 = vpop.permute.xlu0 %1624
      %1635 = vrot.lane.b32.xlu0 %v1426, 24
      %v1636 = vpop.permute.xlu0 %1635
      %1637 = vrot.lane.b32.xlu0 %v1428, 24
      %v1638 = vpop.permute.xlu0 %1637
      %1639 = vrot.lane.b32.xlu0 %v1430, 24
      %v1640 = vpop.permute.xlu0 %1639
      %1641 = vrot.lane.b32.xlu0 %v1432, 24
      %v1642 = vpop.permute.xlu0 %1641
      %1643 = vrot.lane.b32.xlu0 %v1434, 24
      %v1644 = vpop.permute.xlu0 %1643
      %1645 = vrot.lane.b32.xlu0 %v1436, 24
      %v1646 = vpop.permute.xlu0 %1645
      %1647 = vrot.lane.b32.xlu0 %v1438, 24
      %v1648 = vpop.permute.xlu0 %1647
      %1649 = vrot.lane.b32.xlu0 %v1440, 24
      %v1650 = vpop.permute.xlu0 %1649
      %v1660 = vrot.slane %v1440, 1
      %v1661 = vrot.slane %v1441, 1
      %v1662 = vsel %vm392, %v1660, %v1661
      %1663 = vrot.lane.b32.xlu0 %v1466, 28
      %v1664 = vpop.permute.xlu0 %1663
      %1665 = vrot.lane.b32.xlu0 %v1469, 28
      %v1666 = vpop.permute.xlu0 %1665
      %1667 = vrot.lane.b32.xlu0 %v1472, 28
      %v1668 = vpop.permute.xlu0 %1667
      %1669 = vrot.lane.b32.xlu0 %v1475, 28
      %v1670 = vpop.permute.xlu0 %1669
      %1671 = vrot.lane.b32.xlu0 %v1478, 28
      %v1672 = vpop.permute.xlu0 %1671
      %1673 = vrot.lane.b32.xlu0 %v1481, 28
      %v1674 = vpop.permute.xlu0 %1673
      %1675 = vrot.lane.b32.xlu0 %v1582, 28
      %v1676 = vpop.permute.xlu0 %1675
      %1677 = vrot.lane.b32.xlu0 %v1662, 28
      %v1678 = vpop.permute.xlu0 %1677
      %v1687 = vrot.slane %v1440, 2
      %v1688 = vrot.slane %v1441, 2
      %v1689 = vsel %vm489, %v1687, %v1688
      %1690 = vrot.lane.b32.xlu0 %v1514, 32
      %v1691 = vpop.permute.xlu0 %1690
      %1692 = vrot.lane.b32.xlu0 %v1517, 32
      %v1693 = vpop.permute.xlu0 %1692
      %1694 = vrot.lane.b32.xlu0 %v1520, 32
      %v1695 = vpop.permute.xlu0 %1694
      %1696 = vrot.lane.b32.xlu0 %v1523, 32
      %v1697 = vpop.permute.xlu0 %1696
      %1698 = vrot.lane.b32.xlu0 %v1526, 32
      %v1699 = vpop.permute.xlu0 %1698
      %1700 = vrot.lane.b32.xlu0 %v1529, 32
      %v1701 = vpop.permute.xlu0 %1700
      %1702 = vrot.lane.b32.xlu0 %v1609, 32
      %v1703 = vpop.permute.xlu0 %1702
      %1704 = vrot.lane.b32.xlu0 %v1689, 32
      %v1705 = vpop.permute.xlu0 %1704
      %v1714 = vsel %vm1391, %v1422, %v1483
      %v1715 = vsel %vm1391, %v1424, %v1485
      %v1716 = vsel %vm1391, %v1426, %v1487
      %v1717 = vsel %vm1391, %v1428, %v1489
      %v1718 = vsel %vm1391, %v1430, %v1491
      %v1719 = vsel %vm1391, %v1432, %v1493
      %v1720 = vsel %vm1391, %v1434, %v1495
      %v1721 = vsel %vm1391, %v1436, %v1497
      %v1722 = vsel %vm269, %v1714, %v1531
      %v1723 = vsel %vm269, %v1715, %v1533
      %v1724 = vsel %vm269, %v1716, %v1535
      %v1725 = vsel %vm269, %v1717, %v1537
      %v1726 = vsel %vm269, %v1718, %v1539
      %v1727 = vsel %vm269, %v1719, %v1541
      %v1728 = vsel %vm269, %v1720, %v1543
      %v1729 = vsel %vm269, %v1721, %v1545
      %vm1730 = vcmask 97280
      %v1731 = vsel %vm1730, %v1722, %v1556
      %v1732 = vsel %vm1730, %v1723, %v1558
      %v1733 = vsel %vm1730, %v1724, %v1560
      %v1734 = vsel %vm1730, %v1725, %v1562
      %v1735 = vsel %vm1730, %v1726, %v1564
      %v1736 = vsel %vm1730, %v1727, %v1566
      %v1737 = vsel %vm1730, %v1728, %v1568
      %v1738 = vsel %vm1730, %v1729, %v1570
      %v1739 = vsel %vm906, %v1731, %v1584
      %v1740 = vsel %vm906, %v1732, %v1586
      %v1741 = vsel %vm906, %v1733, %v1588
      %v1742 = vsel %vm906, %v1734, %v1590
      %v1743 = vsel %vm906, %v1735, %v1592
      %v1744 = vsel %vm906, %v1736, %v1594
      %v1745 = vsel %vm906, %v1737, %v1596
      %v1746 = vsel %vm906, %v1738, %v1598
      %vm1747 = vcmask 162816
      %v1748 = vsel %vm1747, %v1739, %v1611
      %v1749 = vsel %vm1747, %v1740, %v1613
      %v1750 = vsel %vm1747, %v1741, %v1615
      %v1751 = vsel %vm1747, %v1742, %v1617
      %v1752 = vsel %vm1747, %v1743, %v1619
      %v1753 = vsel %vm1747, %v1744, %v1621
      %v1754 = vsel %vm1747, %v1745, %v1623
      %v1755 = vsel %vm1747, %v1746, %v1625
      %v1756 = vsel %vm923, %v1748, %v1636
      %v1757 = vsel %vm923, %v1749, %v1638
      %v1758 = vsel %vm923, %v1750, %v1640
      %v1759 = vsel %vm923, %v1751, %v1642
      %v1760 = vsel %vm923, %v1752, %v1644
      %v1761 = vsel %vm923, %v1753, %v1646
      %v1762 = vsel %vm923, %v1754, %v1648
      %v1763 = vsel %vm923, %v1755, %v1650
      %vm1764 = vcmask 228352
      %v1765 = vsel %vm1764, %v1756, %v1664
      %v1766 = vsel %vm1764, %v1757, %v1666
      %v1767 = vsel %vm1764, %v1758, %v1668
      %v1768 = vsel %vm1764, %v1759, %v1670
      %v1769 = vsel %vm1764, %v1760, %v1672
      %v1770 = vsel %vm1764, %v1761, %v1674
      %v1771 = vsel %vm1764, %v1762, %v1676
      %v1772 = vsel %vm1764, %v1763, %v1678
      %v1773 = vsel %vm940, %v1765, %v1691
      %v1774 = vsel %vm940, %v1766, %v1693
      %v1775 = vsel %vm940, %v1767, %v1695
      %v1776 = vsel %vm940, %v1768, %v1697
      %v1777 = vsel %vm940, %v1769, %v1699
      %v1778 = vsel %vm940, %v1770, %v1701
      %v1779 = vsel %vm940, %v1771, %v1703
      %v1780 = vsel %vm940, %v1772, %v1705
      %v1781 = vpack.c.bf16 %v1774, %v1773
      %v1782 = vpack.c.bf16 %v1776, %v1775
      %v1783 = vpack.c.bf16 %v1778, %v1777
      %v1784 = vpack.c.bf16 %v1780, %v1779
      %v1785 = vld [vmem:[%s3] sm:$0xf]
      %v1786 = vld [vmem:[%s3 + $0x4] sm:$0xf]
      %v1787 = vld [vmem:[%s3 + $0x8] sm:$0xf]
      %v1788 = vld [vmem:[%s3 + $0xc] sm:$0xf]
      %v1789 = vld [vmem:[%s3 + $0x10] sm:$0x3]
      %v1790 = vld [vmem:[%s4] sm:$0x1]
      %v1792 = vperm.slane %v1790, 0
      %v1799 = vunpack.c.l.b16 %v1785
      %v1800 = vunpack.c.l.b16 %v1786
      %v1801 = vunpack.c.l.b16 %v1787
      %v1802 = vunpack.c.l.b16 %v1788
      %v1803 = vunpack.c.l.b16 %v1789
      %v1804 = vpack.c.b16 %v1800, %v1799
      %v1805 = vpack.c.b16 %v1802, %v1801
      %v1806 = vpack.c.b16 %v1803, %v1803
      %vm1809 = vcmask 293888
      %v1811 = vsel %vm1809, %v1781, 0
      %v1814 = vsel %vm1809, %v1782, 0
      %v1817 = vsel %vm1809, %v1783, 0
      %v1820 = vsel %vm1809, %v1784, 0
      %vm1822 = vcmask 1041408
      %v1824 = vsel %vm1822, %v1806, 0
      %1826 = vmatpush.bf16.msra.mxu0 0
      %1827 = vmatpush.bf16.msra.mxu0 0
      %1828 = vmatpush.bf16.msra.mxu0 0
      %1829 = vmatpush.bf16.msra.mxu0 0
      %1830 = vmatpush.bf16.msra.mxu0 0
      %1831 = vmatpush.bf16.msra.mxu0 %v1824
      %1832 = vmatpush.bf16.msra.mxu0 %v1805
      %1833 = vmatpush.bf16.msra.mxu0 %v1804
      %1834 = vmatmul.bf16.gmra.mxu0 %v1811
      %v1835 = vpop.f32.mrf.mxu0
      %v1836 = vadd.f32 %v1792, %v1835
      %v1837 = vpop.f32.mrf.mxu0
      %v1838 = vadd.f32 %v1792, %v1837
      %1839 = vmatmul.bf16.gmra.mxu0 %v1814
      %v1840 = vpop.f32.mrf.mxu0
      %v1841 = vadd.f32 %v1792, %v1840
      %v1842 = vpop.f32.mrf.mxu0
      %v1843 = vadd.f32 %v1792, %v1842
      %1844 = vmatmul.bf16.gmra.mxu0 %v1817
      %v1845 = vpop.f32.mrf.mxu0
      %v1846 = vadd.f32 %v1792, %v1845
      %v1847 = vpop.f32.mrf.mxu0
      %v1848 = vadd.f32 %v1792, %v1847
      %1849 = vmatmul.bf16.gmra.mxu0 %v1820
      %v1850 = vpop.f32.mrf.mxu0
      %v1851 = vadd.f32 %v1792, %v1850
      %v1852 = vpop.f32.mrf.mxu0
      %v1853 = vadd.f32 %v1792, %v1852
      %1854 = vdwg.mxu0
      %vm1855 = vcmp.ge.f32.partialorder %v1836, 0.0
      %vm1856 = vcmp.ge.f32.partialorder %v1838, 0.0
      %vm1857 = vcmp.ge.f32.partialorder %v1841, 0.0
      %vm1858 = vcmp.ge.f32.partialorder %v1843, 0.0
      %vm1859 = vcmp.ge.f32.partialorder %v1846, 0.0
      %vm1860 = vcmp.ge.f32.partialorder %v1848, 0.0
      %vm1861 = vcmp.ge.f32.partialorder %v1851, 0.0
      %vm1862 = vcmp.ge.f32.partialorder %v1853, 0.0
      %v1863 = vmul.f32 %v1836, 0.2
      %v1864 = vmul.f32 %v1838, 0.2
      %v1865 = vmul.f32 %v1841, 0.2
      %v1866 = vmul.f32 %v1843, 0.2
      %v1867 = vmul.f32 %v1846, 0.2
      %v1868 = vmul.f32 %v1848, 0.2
      %v1869 = vmul.f32 %v1851, 0.2
      %v1870 = vmul.f32 %v1853, 0.2
      %v1871 = vsel %vm1855, %v1836, %v1863
      %v1872 = vsel %vm1856, %v1838, %v1864
      %v1873 = vsel %vm1857, %v1841, %v1865
      %v1874 = vsel %vm1858, %v1843, %v1866
      %v1875 = vsel %vm1859, %v1846, %v1867
      %v1876 = vsel %vm1860, %v1848, %v1868
      %v1877 = vsel %vm1861, %v1851, %v1869
      %v1878 = vsel %vm1862, %v1853, %v1870
      %v1879 = vpack.c.bf16 %v1384, %v1383
      %v1880 = vpack.c.bf16 %v1386, %v1385
      %v1881 = vpack.c.bf16 %v1388, %v1387
      %v1882 = vpack.c.bf16 %v1390, %v1389
      %v1883 = vld [vmem:[%s5] sm:$0x3]
      %v1885 = vsel %vm1391, %v1879, 0
      %v1888 = vsel %vm1391, %v1880, 0
      %v1891 = vsel %vm1391, %v1881, 0
      %v1894 = vsel %vm1391, %v1882, 0
      %v1897 = vsel %vm1822, %v1883, 0
      %1899 = vmatpush.bf16.msra.mxu0 0
      %1900 = vmatpush.bf16.msra.mxu0 0
      %1901 = vmatpush.bf16.msra.mxu0 0
      %1902 = vmatpush.bf16.msra.mxu0 0
      %1903 = vmatpush.bf16.msra.mxu0 0
      %1904 = vmatpush.bf16.msra.mxu0 0
      %1905 = vmatpush.bf16.msra.mxu0 0
      %1906 = vmatpush.bf16.msra.mxu0 %v1897
      %1907 = vmatmul.bf16.gmra.mxu0 %v1885
      %v1908 = vpop.f32.mrf.mxu0
      %v1909 = vadd.f32 0.0, %v1908
      %v1910 = vpop.f32.mrf.mxu0
      %v1911 = vadd.f32 0.0, %v1910
      %1912 = vmatmul.bf16.gmra.mxu0 %v1888
      %v1913 = vpop.f32.mrf.mxu0
      %v1914 = vadd.f32 0.0, %v1913
      %v1915 = vpop.f32.mrf.mxu0
      %v1916 = vadd.f32 0.0, %v1915
      %1917 = vmatmul.bf16.gmra.mxu0 %v1891
      %v1918 = vpop.f32.mrf.mxu0
      %v1919 = vadd.f32 0.0, %v1918
      %v1920 = vpop.f32.mrf.mxu0
      %v1921 = vadd.f32 0.0, %v1920
      %1922 = vmatmul.bf16.gmra.mxu0 %v1894
      %v1923 = vpop.f32.mrf.mxu0
      %v1924 = vadd.f32 0.0, %v1923
      %v1925 = vpop.f32.mrf.mxu0
      %v1926 = vadd.f32 0.0, %v1925
      %1927 = vdwg.mxu0
      %v1928 = vadd.f32 %v1871, %v1909
      %v1929 = vadd.f32 %v1872, %v1911
      %v1930 = vadd.f32 %v1873, %v1914
      %v1931 = vadd.f32 %v1874, %v1916
      %v1932 = vadd.f32 %v1875, %v1919
      %v1933 = vadd.f32 %v1876, %v1921
      %v1934 = vadd.f32 %v1877, %v1924
      %v1935 = vadd.f32 %v1878, %v1926
      %1936 = vst.msk [vmem:[%s251] sm:$0xff] %vm269, %v1928
      %1937 = vst.msk [vmem:[%s251 + $0x8] sm:$0xff] %vm269, %v1929
      %1938 = vst.msk [vmem:[%s251 + $0x10] sm:$0xff] %vm269, %v1930
      %1939 = vst.msk [vmem:[%s251 + $0x18] sm:$0xff] %vm269, %v1931
      %1940 = vst.msk [vmem:[%s251 + $0x20] sm:$0xff] %vm269, %v1932
      %1941 = vst.msk [vmem:[%s251 + $0x28] sm:$0xff] %vm269, %v1933
      %1942 = vst.msk [vmem:[%s251 + $0x30] sm:$0xff] %vm269, %v1934
      %1943 = vst.msk [vmem:[%s251 + $0x38] sm:$0xff] %vm269, %v1935
      %p1944 = scmp.lt.s32.totalorder %s17, 1
      %s1945 = scalar_select %p1944, %s17, 1
      %s1946 = smul.addr %s1945, 8
      %s1947 = smul.addr %s1946, 8
      %s1948 = scalar_lea.vmem %s6, %s1947
      // Predicated region
      $region45: #{tpu_custom_call.1} parent=43 // pred_check
        %p1949 = pneg %p166
      $region46: #{tpu_custom_call.1} parent=43 // pred_check_branch
        %1951 = sbr.rel (%p1949) target = $region48
      $region47: #{tpu_custom_call.1} parent=43 // pred_region
        _
      $region48: #{tpu_custom_call.1} parent=43 // pred_fallthru
        _
    $region44: #{tpu_custom_call.1} parent=5 // pred_fallthru
      _
    %p1952 = scmp.le.s32.totalorder 2, %s12
    // Predicated region
    $region49: #{tpu_custom_call.1} parent=5 // pred_check
      %p1953 = pneg %p1952
    $region50: #{tpu_custom_call.1} parent=5 // pred_check_branch
      %1955 = sbr.rel (%p1953) target = $region52
    $region51: #{tpu_custom_call.1} parent=5 // pred_region
      %s1956 = ssub.s32 %s12, 2
      // Predicated region
      $region53: #{tpu_custom_call.1} parent=51 // pred_check
        %p1957 = pneg %p172
      $region54: #{tpu_custom_call.1} parent=51 // pred_check_branch
        %1959 = sbr.rel (%p1957) target = $region56
      $region55: #{tpu_custom_call.1} parent=51 // pred_region
        %p1960 = scmp.lt.s32.totalorder %s18, 1
        %s1961 = scalar_select %p1960, %s18, 1
        %s1962 = smul.addr %s1961, 8
        %s1963 = smul.addr %s1962, 8
        %s1964 = scalar_lea.vmem %s6, %s1963
      $region56: #{tpu_custom_call.1} parent=51 // pred_fallthru
        _
    $region52: #{tpu_custom_call.1} parent=5 // pred_fallthru
      _
  $region6: #{tpu_custom_call.1} parent=0 // loop_footer
    %s16 = sadd.s32 1, %s12
  $region7: #{tpu_custom_call.1} parent=0 // loop_footer_branch
    %11 = sbr.rel target = $region3
  $region8: #{tpu_custom_call.1} parent=0 // loop_exit
    _

</llo_original>
